<compile_context>
chip_gen: v7x
topology: tpu7x:2x2x1
jax: 0.10.0
libtpu: 0.0.40
codegen_flags: <defaults>
</compile_context>

<pallas_src>
import functools

import jax
import jax.numpy as jnp
from jax.experimental import pallas as pl
from jax.experimental.pallas import tpu as pltpu


def _round_up(x, m):
    return (x + m - 1) // m * m


def _pick_divisor(dim, candidates):
    for c in candidates:
        if dim % c == 0:
            return c
    return None


# ---------------------------------------------------------------------------
# Kernel 1: batched embedding row gather (token rows), table stays in HBM.
# Emits both f32 rows (inputs_embeds) and bf16 rows (LM-head operand).
# ---------------------------------------------------------------------------
def _gather_kernel(idx_ref, table_ref, out_f32_ref, out_bf16_ref,
                   row_buf, sems, *, rows_per_step):
    base = pl.program_id(0) * rows_per_step
    copies = []
    for g in range(rows_per_step):           # static, unrolled
        cp = pltpu.make_async_copy(
            table_ref.at[idx_ref[base + g]],  # (D,) row in HBM
            row_buf.at[g],                    # (D,) row in VMEM scratch
            sems.at[g])
        cp.start()
        copies.append(cp)
    for cp in copies:
        cp.wait()
    rows = row_buf[...]
    out_f32_ref[...] = rows.astype(out_f32_ref.dtype)
    out_bf16_ref[...] = rows.astype(out_bf16_ref.dtype)


def gather_embeddings(row_idx, table):
    """table[row_idx] -> (rows_f32, rows_bf16); table is never VMEM-resident.

    row_idx: (M,) int32 (already clamped to [0, R)).
    table:   (R, D) float32 embedding table.
    """
    (M,) = row_idx.shape
    R, D = table.shape
    G = min(32, _round_up(M, 8))              # rows per grid step
    M_pad = _round_up(M, G)
    if M_pad != M:
        row_idx = jnp.pad(row_idx, (0, M_pad - M))

    out_f32, out_bf16 = pl.pallas_call(
        functools.partial(_gather_kernel, rows_per_step=G),
        out_shape=(jax.ShapeDtypeStruct((M_pad, D), jnp.float32),
                   jax.ShapeDtypeStruct((M_pad, D), jnp.bfloat16)),
        grid_spec=pltpu.PrefetchScalarGridSpec(
            num_scalar_prefetch=1,
            grid=(M_pad // G,),
            in_specs=[pl.BlockSpec(memory_space=pl.ANY)],
            out_specs=[pl.BlockSpec((G, D), lambda i, idx: (i, 0)),
                       pl.BlockSpec((G, D), lambda i, idx: (i, 0))],
            scratch_shapes=[pltpu.VMEM((G, D), table.dtype),
                            pltpu.SemaphoreType.DMA((G,))]),
        compiler_params=pltpu.CompilerParams(
            dimension_semantics=("parallel",)),
    )(row_idx, table)
    return out_f32[:M], out_bf16[:M]


# ---------------------------------------------------------------------------
# Kernel 2: LM-head matmul  [M, D] @ [D, V] -> [M, V]  (bf16 MXU, f32 output)
# x slab VMEM-resident per i-tile; weight streamed once when tm covers M;
# accumulation directly in the revisit-resident output tile.
# ---------------------------------------------------------------------------
def _lm_head_kernel(x_ref, w_ref, o_ref, *, tk):
    k = pl.program_id(2)

    @pl.when(k == 0)
    def _init():
        o_ref[...] = jnp.zeros_like(o_ref)

    off = pl.multiple_of(k * tk, tk)
    o_ref[...] += jnp.dot(x_ref[:, pl.ds(off, tk)], w_ref[...],
                          preferred_element_type=jnp.float32)


def lm_head_matmul(x, w):
    """x: (M, D) bf16, w: (D, V) bf16 -> (M, V) f32."""
    M, D = x.shape
    D_w, V = w.shape
    assert D == D_w

    # tn/tk chosen as divisors of the real dims (EXAONE: D=4096, V=102400)
    # so the D x V weight is never padded/copied; only M (cheap) is padded.
    tk = _pick_divisor(D, (1024, 512, 256, 128)) or min(_round_up(D, 128), 1024)
    tn = _pick_divisor(V, (1024, 512, 256, 128)) or min(_round_up(V, 128), 1024)
    D_pad = _round_up(D, tk)
    V_pad = _round_up(V, tn)
    if D_pad != D:                     # fallback only; no-op for aligned dims
        x = jnp.pad(x, ((0, 0), (0, D_pad - D)))
        w = jnp.pad(w, ((0, D_pad - D), (0, 0)))
    if V_pad != V:
        w = jnp.pad(w, ((0, 0), (0, V_pad - V)))

    # tm: cover all of M in one tile (multiple of 256 for the 256-wide MXU)
    # within a scoped-VMEM budget that is safe on v7x (64 MiB/TC) as well as
    # v5e/v6e, so the weight is read from HBM exactly once.
    budget = 36 * 1024 * 1024

    def footprint(tm_):
        return (2 * tm_ * D_pad * 2    # x slab, bf16, double-buffered
                + 2 * tk * tn * 2      # w tile, bf16, double-buffered
                + 2 * tm_ * tn * 4)    # f32 output tile, double-buffered

    tm = _round_up(max(M, 1), 256)
    while tm > 256 and footprint(tm) > budget:
        tm -= 256
    M_pad = _round_up(M, tm)
    if M_pad != M:
        x = jnp.pad(x, ((0, M_pad - M), (0, 0)))

    grid = (M_pad // tm, V_pad // tn, D_pad // tk)
    flops = 2 * M_pad * D_pad * V_pad
    bytes_accessed = M_pad * D_pad * 2 + D_pad * V_pad * 2 + M_pad * V_pad * 4
    vmem_limit = int(min(max(footprint(tm) + 8 * 1024 * 1024,
                             16 * 1024 * 1024),
                         48 * 1024 * 1024))

    out = pl.pallas_call(
        functools.partial(_lm_head_kernel, tk=tk),
        out_shape=jax.ShapeDtypeStruct((M_pad, V_pad), jnp.float32),
        grid_spec=pltpu.PrefetchScalarGridSpec(
            num_scalar_prefetch=0,
            grid=grid,
            in_specs=[pl.BlockSpec((tm, D_pad), lambda i, j, k: (i, 0)),
                      pl.BlockSpec((tk, tn), lambda i, j, k: (k, j))],
            out_specs=pl.BlockSpec((tm, tn), lambda i, j, k: (i, j))),
        compiler_params=pltpu.CompilerParams(
            dimension_semantics=("parallel", "parallel", "arbitrary"),
            vmem_limit_bytes=vmem_limit),
        cost_estimate=pl.CostEstimate(flops=flops, transcendentals=0,
                                      bytes_accessed=bytes_accessed),
    )(x, w)
    return out[:M, :V]


# ---------------------------------------------------------------------------
# Forward pass of ModelWithPrompt
# ---------------------------------------------------------------------------
def model_with_prompt_forward(input_ids, prompt_table, token_table, lm_w,
                              attention_mask=None, labels=None):
    """Returns (inputs_embeds, logits).

    input_ids:    (B, S)  int32
    prompt_table: (Nv, D) float32   (row i == prompt_encoder(i))
    token_table:  (V, D)  float32   input embedding table
    lm_w:         (D, V)  bf16      LM head weight
    """
    del attention_mask, labels   # TODO(synk): loss / masking not reproduced.
    B, S = input_ids.shape
    Nv, D = prompt_table.shape
    V_emb = token_table.shape[0]
    V = lm_w.shape[1]
    T = Nv + S

    # token_embeds = embedding(input_ids): clamped row gather from HBM table.
    ids = jnp.clip(input_ids.astype(jnp.int32), 0, V_emb - 1).reshape(B * S)
    tok_f32, tok_bf16 = gather_embeddings(ids, token_table)     # (B*S, D)

    # inputs_embeds = cat([prompt_embeds.expand(B,...), token_embeds], dim=1).
    prompt_f32 = jnp.broadcast_to(prompt_table[None], (B, Nv, D))
    inputs_embeds = jnp.concatenate(
        [prompt_f32, tok_f32.reshape(B, S, D)], axis=1)          # (B, T, D)

    # LM head operand in bf16 (cast of token rows already done in the gather;
    # prompt block is only Nv x D).
    prompt_bf16 = jnp.broadcast_to(
        prompt_table.astype(jnp.bfloat16)[None], (B, Nv, D))
    x_bf16 = jnp.concatenate(
        [prompt_bf16, tok_bf16.reshape(B, S, D)], axis=1).reshape(B * T, D)

    logits = lm_head_matmul(x_bf16, lm_w).reshape(B, T, V)
    return inputs_embeds, logits


if __name__ == "__main__":
    # Small, module-consistent shapes (D and V lane-aligned: multiples of 128).
    B = 2      # batch
    S = 8      # input sequence length
    Nv = 2     # prompt_config.num_virtual_tokens
    D = 128    # token_dim / hidden_size (synthetic, lane-aligned)
    V = 256    # vocab size (synthetic, multiple of 128 -> lane-dense logits)

    key = jax.random.PRNGKey(0)
    k_ids, k_prompt, k_tok, k_lm = jax.random.split(key, 4)

    input_ids = jax.random.randint(k_ids, (B, S), 0, V, dtype=jnp.int32)
    prompt_table = jax.random.normal(k_prompt, (Nv, D), dtype=jnp.float32) * 0.02
    token_table = jax.random.normal(k_tok, (V, D), dtype=jnp.float32) * 0.02
    lm_w = (jax.random.normal(k_lm, (D, V), dtype=jnp.float32) * 0.02
            ).astype(jnp.bfloat16)

    fwd = jax.jit(model_with_prompt_forward)
    inputs_embeds, logits = jax.block_until_ready(
        fwd(input_ids, prompt_table, token_table, lm_w))

    # Pure-JAX reference (same bf16 operands / f32 accumulation as the kernel).
    prompt_b_ref = jnp.broadcast_to(prompt_table[None], (B, Nv, D))
    token_embeds_ref = token_table[input_ids]                       # (B, S, D)
    embeds_ref = jnp.concatenate([prompt_b_ref, token_embeds_ref], axis=1)
    logits_ref = jnp.einsum('btd,dv->btv',
                            embeds_ref.astype(jnp.bfloat16), lm_w,
                            preferred_element_type=jnp.float32)

    assert inputs_embeds.shape == (B, Nv + S, D)
    assert logits.shape == (B, Nv + S, V)
    assert jnp.allclose(inputs_embeds, embeds_ref, atol=1e-6, rtol=1e-6)
    assert jnp.allclose(logits, logits_ref, atol=1e-4, rtol=1e-2)

    print("KERNEL_OK")
</pallas_src>

<mosaic_0001>
module attributes {stable_mosaic.version = 11 : i64} {
  func.func @_gather_kernel(%arg0: i32, %arg1: memref<16xi32, #tpu.memory_space<smem>>, %arg2: memref<256x128xf32, #tpu.memory_space<any>>, %arg3: memref<16x128xf32, #tpu.memory_space<vmem>>, %arg4: memref<16x128xbf16, #tpu.memory_space<vmem>>, %arg5: memref<16x128xf32, #tpu.memory_space<vmem>>, %arg6: memref<16x!tpu.dma_semaphore, #tpu.memory_space<semaphore_mem>>) attributes {dimension_semantics = [#tpu.dimension_semantics<parallel>], iteration_bounds = array<i64: 1>, scalar_prefetch = 1 : i64, scratch_operands = 2 : i64, tpu.core_type = #tpu.core_type<tc>, window_params = [{}, {transform_indices = @transform_1, window_bounds = array<i64: 16, 128>}, {transform_indices = @transform_2, window_bounds = array<i64: 16, 128>}]} {
    %c16_i32 = arith.constant 16 : i32
    %0 = arith.muli %arg0, %c16_i32 : i32
    %c0_i32 = arith.constant 0 : i32
    %1 = arith.addi %0, %c0_i32 : i32
    %2 = arith.index_cast %1 : i32 to index
    %3 = memref.load %arg1[%2] : memref<16xi32, #tpu.memory_space<smem>>
    %c0_i32_0 = arith.constant 0 : i32
    %c0_i32_1 = arith.constant 0 : i32
    %c0_i32_2 = arith.constant 0 : i32
    %4 = tpu.memref_slice %arg2[%3, %c0_i32_2] : memref<256x128xf32, #tpu.memory_space<any>> -> memref<1x128xf32, #tpu.memory_space<any>>
    %5 = tpu.memref_squeeze %4 : memref<1x128xf32, #tpu.memory_space<any>> -> memref<128xf32, #tpu.memory_space<any>>
    %c0_i32_3 = arith.constant 0 : i32
    %6 = tpu.memref_slice %arg5[%c0_i32_0, %c0_i32_3] : memref<16x128xf32, #tpu.memory_space<vmem>> -> memref<1x128xf32, #tpu.memory_space<vmem>>
    %7 = tpu.memref_squeeze %6 : memref<1x128xf32, #tpu.memory_space<vmem>> -> memref<128xf32, #tpu.memory_space<vmem>>
    %8 = tpu.memref_slice %arg6[%c0_i32_1] : memref<16x!tpu.dma_semaphore, #tpu.memory_space<semaphore_mem>> -> memref<1x!tpu.dma_semaphore, #tpu.memory_space<semaphore_mem>>
    %9 = tpu.memref_squeeze %8 : memref<1x!tpu.dma_semaphore, #tpu.memory_space<semaphore_mem>> -> memref<!tpu.dma_semaphore, #tpu.memory_space<semaphore_mem>>
    tpu.enqueue_dma source(%5 : memref<128xf32, #tpu.memory_space<any>>) target(%7 : memref<128xf32, #tpu.memory_space<vmem>>) target_semaphore(%9 : memref<!tpu.dma_semaphore, #tpu.memory_space<semaphore_mem>>)
    %c1_i32 = arith.constant 1 : i32
    %10 = arith.addi %0, %c1_i32 : i32
    %11 = arith.index_cast %10 : i32 to index
    %12 = memref.load %arg1[%11] : memref<16xi32, #tpu.memory_space<smem>>
    %c1_i32_4 = arith.constant 1 : i32
    %c1_i32_5 = arith.constant 1 : i32
    %c0_i32_6 = arith.constant 0 : i32
    %13 = tpu.memref_slice %arg2[%12, %c0_i32_6] : memref<256x128xf32, #tpu.memory_space<any>> -> memref<1x128xf32, #tpu.memory_space<any>>
    %14 = tpu.memref_squeeze %13 : memref<1x128xf32, #tpu.memory_space<any>> -> memref<128xf32, #tpu.memory_space<any>>
    %c0_i32_7 = arith.constant 0 : i32
    %15 = tpu.memref_slice %arg5[%c1_i32_4, %c0_i32_7] : memref<16x128xf32, #tpu.memory_space<vmem>> -> memref<1x128xf32, #tpu.memory_space<vmem>>
    %16 = tpu.memref_squeeze %15 : memref<1x128xf32, #tpu.memory_space<vmem>> -> memref<128xf32, #tpu.memory_space<vmem>>
    %17 = tpu.memref_slice %arg6[%c1_i32_5] : memref<16x!tpu.dma_semaphore, #tpu.memory_space<semaphore_mem>> -> memref<1x!tpu.dma_semaphore, #tpu.memory_space<semaphore_mem>>
    %18 = tpu.memref_squeeze %17 : memref<1x!tpu.dma_semaphore, #tpu.memory_space<semaphore_mem>> -> memref<!tpu.dma_semaphore, #tpu.memory_space<semaphore_mem>>
    tpu.enqueue_dma source(%14 : memref<128xf32, #tpu.memory_space<any>>) target(%16 : memref<128xf32, #tpu.memory_space<vmem>>) target_semaphore(%18 : memref<!tpu.dma_semaphore, #tpu.memory_space<semaphore_mem>>)
    %c2_i32 = arith.constant 2 : i32
    %19 = arith.addi %0, %c2_i32 : i32
    %20 = arith.index_cast %19 : i32 to index
    %21 = memref.load %arg1[%20] : memref<16xi32, #tpu.memory_space<smem>>
    %c2_i32_8 = arith.constant 2 : i32
    %c2_i32_9 = arith.constant 2 : i32
    %c0_i32_10 = arith.constant 0 : i32
    %22 = tpu.memref_slice %arg2[%21, %c0_i32_10] : memref<256x128xf32, #tpu.memory_space<any>> -> memref<1x128xf32, #tpu.memory_space<any>>
    %23 = tpu.memref_squeeze %22 : memref<1x128xf32, #tpu.memory_space<any>> -> memref<128xf32, #tpu.memory_space<any>>
    %c0_i32_11 = arith.constant 0 : i32
    %24 = tpu.memref_slice %arg5[%c2_i32_8, %c0_i32_11] : memref<16x128xf32, #tpu.memory_space<vmem>> -> memref<1x128xf32, #tpu.memory_space<vmem>>
    %25 = tpu.memref_squeeze %24 : memref<1x128xf32, #tpu.memory_space<vmem>> -> memref<128xf32, #tpu.memory_space<vmem>>
    %26 = tpu.memref_slice %arg6[%c2_i32_9] : memref<16x!tpu.dma_semaphore, #tpu.memory_space<semaphore_mem>> -> memref<1x!tpu.dma_semaphore, #tpu.memory_space<semaphore_mem>>
    %27 = tpu.memref_squeeze %26 : memref<1x!tpu.dma_semaphore, #tpu.memory_space<semaphore_mem>> -> memref<!tpu.dma_semaphore, #tpu.memory_space<semaphore_mem>>
    tpu.enqueue_dma source(%23 : memref<128xf32, #tpu.memory_space<any>>) target(%25 : memref<128xf32, #tpu.memory_space<vmem>>) target_semaphore(%27 : memref<!tpu.dma_semaphore, #tpu.memory_space<semaphore_mem>>)
    %c3_i32 = arith.constant 3 : i32
    %28 = arith.addi %0, %c3_i32 : i32
    %29 = arith.index_cast %28 : i32 to index
    %30 = memref.load %arg1[%29] : memref<16xi32, #tpu.memory_space<smem>>
    %c3_i32_12 = arith.constant 3 : i32
    %c3_i32_13 = arith.constant 3 : i32
    %c0_i32_14 = arith.constant 0 : i32
    %31 = tpu.memref_slice %arg2[%30, %c0_i32_14] : memref<256x128xf32, #tpu.memory_space<any>> -> memref<1x128xf32, #tpu.memory_space<any>>
    %32 = tpu.memref_squeeze %31 : memref<1x128xf32, #tpu.memory_space<any>> -> memref<128xf32, #tpu.memory_space<any>>
    %c0_i32_15 = arith.constant 0 : i32
    %33 = tpu.memref_slice %arg5[%c3_i32_12, %c0_i32_15] : memref<16x128xf32, #tpu.memory_space<vmem>> -> memref<1x128xf32, #tpu.memory_space<vmem>>
    %34 = tpu.memref_squeeze %33 : memref<1x128xf32, #tpu.memory_space<vmem>> -> memref<128xf32, #tpu.memory_space<vmem>>
    %35 = tpu.memref_slice %arg6[%c3_i32_13] : memref<16x!tpu.dma_semaphore, #tpu.memory_space<semaphore_mem>> -> memref<1x!tpu.dma_semaphore, #tpu.memory_space<semaphore_mem>>
    %36 = tpu.memref_squeeze %35 : memref<1x!tpu.dma_semaphore, #tpu.memory_space<semaphore_mem>> -> memref<!tpu.dma_semaphore, #tpu.memory_space<semaphore_mem>>
    tpu.enqueue_dma source(%32 : memref<128xf32, #tpu.memory_space<any>>) target(%34 : memref<128xf32, #tpu.memory_space<vmem>>) target_semaphore(%36 : memref<!tpu.dma_semaphore, #tpu.memory_space<semaphore_mem>>)
    %c4_i32 = arith.constant 4 : i32
    %37 = arith.addi %0, %c4_i32 : i32
    %38 = arith.index_cast %37 : i32 to index
    %39 = memref.load %arg1[%38] : memref<16xi32, #tpu.memory_space<smem>>
    %c4_i32_16 = arith.constant 4 : i32
    %c4_i32_17 = arith.constant 4 : i32
    %c0_i32_18 = arith.constant 0 : i32
    %40 = tpu.memref_slice %arg2[%39, %c0_i32_18] : memref<256x128xf32, #tpu.memory_space<any>> -> memref<1x128xf32, #tpu.memory_space<any>>
    %41 = tpu.memref_squeeze %40 : memref<1x128xf32, #tpu.memory_space<any>> -> memref<128xf32, #tpu.memory_space<any>>
    %c0_i32_19 = arith.constant 0 : i32
    %42 = tpu.memref_slice %arg5[%c4_i32_16, %c0_i32_19] : memref<16x128xf32, #tpu.memory_space<vmem>> -> memref<1x128xf32, #tpu.memory_space<vmem>>
    %43 = tpu.memref_squeeze %42 : memref<1x128xf32, #tpu.memory_space<vmem>> -> memref<128xf32, #tpu.memory_space<vmem>>
    %44 = tpu.memref_slice %arg6[%c4_i32_17] : memref<16x!tpu.dma_semaphore, #tpu.memory_space<semaphore_mem>> -> memref<1x!tpu.dma_semaphore, #tpu.memory_space<semaphore_mem>>
    %45 = tpu.memref_squeeze %44 : memref<1x!tpu.dma_semaphore, #tpu.memory_space<semaphore_mem>> -> memref<!tpu.dma_semaphore, #tpu.memory_space<semaphore_mem>>
    tpu.enqueue_dma source(%41 : memref<128xf32, #tpu.memory_space<any>>) target(%43 : memref<128xf32, #tpu.memory_space<vmem>>) target_semaphore(%45 : memref<!tpu.dma_semaphore, #tpu.memory_space<semaphore_mem>>)
    %c5_i32 = arith.constant 5 : i32
    %46 = arith.addi %0, %c5_i32 : i32
    %47 = arith.index_cast %46 : i32 to index
    %48 = memref.load %arg1[%47] : memref<16xi32, #tpu.memory_space<smem>>
    %c5_i32_20 = arith.constant 5 : i32
    %c5_i32_21 = arith.constant 5 : i32
    %c0_i32_22 = arith.constant 0 : i32
    %49 = tpu.memref_slice %arg2[%48, %c0_i32_22] : memref<256x128xf32, #tpu.memory_space<any>> -> memref<1x128xf32, #tpu.memory_space<any>>
    %50 = tpu.memref_squeeze %49 : memref<1x128xf32, #tpu.memory_space<any>> -> memref<128xf32, #tpu.memory_space<any>>
    %c0_i32_23 = arith.constant 0 : i32
    %51 = tpu.memref_slice %arg5[%c5_i32_20, %c0_i32_23] : memref<16x128xf32, #tpu.memory_space<vmem>> -> memref<1x128xf32, #tpu.memory_space<vmem>>
    %52 = tpu.memref_squeeze %51 : memref<1x128xf32, #tpu.memory_space<vmem>> -> memref<128xf32, #tpu.memory_space<vmem>>
    %53 = tpu.memref_slice %arg6[%c5_i32_21] : memref<16x!tpu.dma_semaphore, #tpu.memory_space<semaphore_mem>> -> memref<1x!tpu.dma_semaphore, #tpu.memory_space<semaphore_mem>>
    %54 = tpu.memref_squeeze %53 : memref<1x!tpu.dma_semaphore, #tpu.memory_space<semaphore_mem>> -> memref<!tpu.dma_semaphore, #tpu.memory_space<semaphore_mem>>
    tpu.enqueue_dma source(%50 : memref<128xf32, #tpu.memory_space<any>>) target(%52 : memref<128xf32, #tpu.memory_space<vmem>>) target_semaphore(%54 : memref<!tpu.dma_semaphore, #tpu.memory_space<semaphore_mem>>)
    %c6_i32 = arith.constant 6 : i32
    %55 = arith.addi %0, %c6_i32 : i32
    %56 = arith.index_cast %55 : i32 to index
    %57 = memref.load %arg1[%56] : memref<16xi32, #tpu.memory_space<smem>>
    %c6_i32_24 = arith.constant 6 : i32
    %c6_i32_25 = arith.constant 6 : i32
    %c0_i32_26 = arith.constant 0 : i32
    %58 = tpu.memref_slice %arg2[%57, %c0_i32_26] : memref<256x128xf32, #tpu.memory_space<any>> -> memref<1x128xf32, #tpu.memory_space<any>>
    %59 = tpu.memref_squeeze %58 : memref<1x128xf32, #tpu.memory_space<any>> -> memref<128xf32, #tpu.memory_space<any>>
    %c0_i32_27 = arith.constant 0 : i32
    %60 = tpu.memref_slice %arg5[%c6_i32_24, %c0_i32_27] : memref<16x128xf32, #tpu.memory_space<vmem>> -> memref<1x128xf32, #tpu.memory_space<vmem>>
    %61 = tpu.memref_squeeze %60 : memref<1x128xf32, #tpu.memory_space<vmem>> -> memref<128xf32, #tpu.memory_space<vmem>>
    %62 = tpu.memref_slice %arg6[%c6_i32_25] : memref<16x!tpu.dma_semaphore, #tpu.memory_space<semaphore_mem>> -> memref<1x!tpu.dma_semaphore, #tpu.memory_space<semaphore_mem>>
    %63 = tpu.memref_squeeze %62 : memref<1x!tpu.dma_semaphore, #tpu.memory_space<semaphore_mem>> -> memref<!tpu.dma_semaphore, #tpu.memory_space<semaphore_mem>>
    tpu.enqueue_dma source(%59 : memref<128xf32, #tpu.memory_space<any>>) target(%61 : memref<128xf32, #tpu.memory_space<vmem>>) target_semaphore(%63 : memref<!tpu.dma_semaphore, #tpu.memory_space<semaphore_mem>>)
    %c7_i32 = arith.constant 7 : i32
    %64 = arith.addi %0, %c7_i32 : i32
    %65 = arith.index_cast %64 : i32 to index
    %66 = memref.load %arg1[%65] : memref<16xi32, #tpu.memory_space<smem>>
    %c7_i32_28 = arith.constant 7 : i32
    %c7_i32_29 = arith.constant 7 : i32
    %c0_i32_30 = arith.constant 0 : i32
    %67 = tpu.memref_slice %arg2[%66, %c0_i32_30] : memref<256x128xf32, #tpu.memory_space<any>> -> memref<1x128xf32, #tpu.memory_space<any>>
    %68 = tpu.memref_squeeze %67 : memref<1x128xf32, #tpu.memory_space<any>> -> memref<128xf32, #tpu.memory_space<any>>
    %c0_i32_31 = arith.constant 0 : i32
    %69 = tpu.memref_slice %arg5[%c7_i32_28, %c0_i32_31] : memref<16x128xf32, #tpu.memory_space<vmem>> -> memref<1x128xf32, #tpu.memory_space<vmem>>
    %70 = tpu.memref_squeeze %69 : memref<1x128xf32, #tpu.memory_space<vmem>> -> memref<128xf32, #tpu.memory_space<vmem>>
    %71 = tpu.memref_slice %arg6[%c7_i32_29] : memref<16x!tpu.dma_semaphore, #tpu.memory_space<semaphore_mem>> -> memref<1x!tpu.dma_semaphore, #tpu.memory_space<semaphore_mem>>
    %72 = tpu.memref_squeeze %71 : memref<1x!tpu.dma_semaphore, #tpu.memory_space<semaphore_mem>> -> memref<!tpu.dma_semaphore, #tpu.memory_space<semaphore_mem>>
    tpu.enqueue_dma source(%68 : memref<128xf32, #tpu.memory_space<any>>) target(%70 : memref<128xf32, #tpu.memory_space<vmem>>) target_semaphore(%72 : memref<!tpu.dma_semaphore, #tpu.memory_space<semaphore_mem>>)
    %c8_i32 = arith.constant 8 : i32
    %73 = arith.addi %0, %c8_i32 : i32
    %74 = arith.index_cast %73 : i32 to index
    %75 = memref.load %arg1[%74] : memref<16xi32, #tpu.memory_space<smem>>
    %c8_i32_32 = arith.constant 8 : i32
    %c8_i32_33 = arith.constant 8 : i32
    %c0_i32_34 = arith.constant 0 : i32
    %76 = tpu.memref_slice %arg2[%75, %c0_i32_34] : memref<256x128xf32, #tpu.memory_space<any>> -> memref<1x128xf32, #tpu.memory_space<any>>
    %77 = tpu.memref_squeeze %76 : memref<1x128xf32, #tpu.memory_space<any>> -> memref<128xf32, #tpu.memory_space<any>>
    %c0_i32_35 = arith.constant 0 : i32
    %78 = tpu.memref_slice %arg5[%c8_i32_32, %c0_i32_35] : memref<16x128xf32, #tpu.memory_space<vmem>> -> memref<1x128xf32, #tpu.memory_space<vmem>>
    %79 = tpu.memref_squeeze %78 : memref<1x128xf32, #tpu.memory_space<vmem>> -> memref<128xf32, #tpu.memory_space<vmem>>
    %80 = tpu.memref_slice %arg6[%c8_i32_33] : memref<16x!tpu.dma_semaphore, #tpu.memory_space<semaphore_mem>> -> memref<1x!tpu.dma_semaphore, #tpu.memory_space<semaphore_mem>>
    %81 = tpu.memref_squeeze %80 : memref<1x!tpu.dma_semaphore, #tpu.memory_space<semaphore_mem>> -> memref<!tpu.dma_semaphore, #tpu.memory_space<semaphore_mem>>
    tpu.enqueue_dma source(%77 : memref<128xf32, #tpu.memory_space<any>>) target(%79 : memref<128xf32, #tpu.memory_space<vmem>>) target_semaphore(%81 : memref<!tpu.dma_semaphore, #tpu.memory_space<semaphore_mem>>)
    %c9_i32 = arith.constant 9 : i32
    %82 = arith.addi %0, %c9_i32 : i32
    %83 = arith.index_cast %82 : i32 to index
    %84 = memref.load %arg1[%83] : memref<16xi32, #tpu.memory_space<smem>>
    %c9_i32_36 = arith.constant 9 : i32
    %c9_i32_37 = arith.constant 9 : i32
    %c0_i32_38 = arith.constant 0 : i32
    %85 = tpu.memref_slice %arg2[%84, %c0_i32_38] : memref<256x128xf32, #tpu.memory_space<any>> -> memref<1x128xf32, #tpu.memory_space<any>>
    %86 = tpu.memref_squeeze %85 : memref<1x128xf32, #tpu.memory_space<any>> -> memref<128xf32, #tpu.memory_space<any>>
    %c0_i32_39 = arith.constant 0 : i32
    %87 = tpu.memref_slice %arg5[%c9_i32_36, %c0_i32_39] : memref<16x128xf32, #tpu.memory_space<vmem>> -> memref<1x128xf32, #tpu.memory_space<vmem>>
    %88 = tpu.memref_squeeze %87 : memref<1x128xf32, #tpu.memory_space<vmem>> -> memref<128xf32, #tpu.memory_space<vmem>>
    %89 = tpu.memref_slice %arg6[%c9_i32_37] : memref<16x!tpu.dma_semaphore, #tpu.memory_space<semaphore_mem>> -> memref<1x!tpu.dma_semaphore, #tpu.memory_space<semaphore_mem>>
    %90 = tpu.memref_squeeze %89 : memref<1x!tpu.dma_semaphore, #tpu.memory_space<semaphore_mem>> -> memref<!tpu.dma_semaphore, #tpu.memory_space<semaphore_mem>>
    tpu.enqueue_dma source(%86 : memref<128xf32, #tpu.memory_space<any>>) target(%88 : memref<128xf32, #tpu.memory_space<vmem>>) target_semaphore(%90 : memref<!tpu.dma_semaphore, #tpu.memory_space<semaphore_mem>>)
    %c10_i32 = arith.constant 10 : i32
    %91 = arith.addi %0, %c10_i32 : i32
    %92 = arith.index_cast %91 : i32 to index
    %93 = memref.load %arg1[%92] : memref<16xi32, #tpu.memory_space<smem>>
    %c10_i32_40 = arith.constant 10 : i32
    %c10_i32_41 = arith.constant 10 : i32
    %c0_i32_42 = arith.constant 0 : i32
    %94 = tpu.memref_slice %arg2[%93, %c0_i32_42] : memref<256x128xf32, #tpu.memory_space<any>> -> memref<1x128xf32, #tpu.memory_space<any>>
    %95 = tpu.memref_squeeze %94 : memref<1x128xf32, #tpu.memory_space<any>> -> memref<128xf32, #tpu.memory_space<any>>
    %c0_i32_43 = arith.constant 0 : i32
    %96 = tpu.memref_slice %arg5[%c10_i32_40, %c0_i32_43] : memref<16x128xf32, #tpu.memory_space<vmem>> -> memref<1x128xf32, #tpu.memory_space<vmem>>
    %97 = tpu.memref_squeeze %96 : memref<1x128xf32, #tpu.memory_space<vmem>> -> memref<128xf32, #tpu.memory_space<vmem>>
    %98 = tpu.memref_slice %arg6[%c10_i32_41] : memref<16x!tpu.dma_semaphore, #tpu.memory_space<semaphore_mem>> -> memref<1x!tpu.dma_semaphore, #tpu.memory_space<semaphore_mem>>
    %99 = tpu.memref_squeeze %98 : memref<1x!tpu.dma_semaphore, #tpu.memory_space<semaphore_mem>> -> memref<!tpu.dma_semaphore, #tpu.memory_space<semaphore_mem>>
    tpu.enqueue_dma source(%95 : memref<128xf32, #tpu.memory_space<any>>) target(%97 : memref<128xf32, #tpu.memory_space<vmem>>) target_semaphore(%99 : memref<!tpu.dma_semaphore, #tpu.memory_space<semaphore_mem>>)
    %c11_i32 = arith.constant 11 : i32
    %100 = arith.addi %0, %c11_i32 : i32
    %101 = arith.index_cast %100 : i32 to index
    %102 = memref.load %arg1[%101] : memref<16xi32, #tpu.memory_space<smem>>
    %c11_i32_44 = arith.constant 11 : i32
    %c11_i32_45 = arith.constant 11 : i32
    %c0_i32_46 = arith.constant 0 : i32
    %103 = tpu.memref_slice %arg2[%102, %c0_i32_46] : memref<256x128xf32, #tpu.memory_space<any>> -> memref<1x128xf32, #tpu.memory_space<any>>
    %104 = tpu.memref_squeeze %103 : memref<1x128xf32, #tpu.memory_space<any>> -> memref<128xf32, #tpu.memory_space<any>>
    %c0_i32_47 = arith.constant 0 : i32
    %105 = tpu.memref_slice %arg5[%c11_i32_44, %c0_i32_47] : memref<16x128xf32, #tpu.memory_space<vmem>> -> memref<1x128xf32, #tpu.memory_space<vmem>>
    %106 = tpu.memref_squeeze %105 : memref<1x128xf32, #tpu.memory_space<vmem>> -> memref<128xf32, #tpu.memory_space<vmem>>
    %107 = tpu.memref_slice %arg6[%c11_i32_45] : memref<16x!tpu.dma_semaphore, #tpu.memory_space<semaphore_mem>> -> memref<1x!tpu.dma_semaphore, #tpu.memory_space<semaphore_mem>>
    %108 = tpu.memref_squeeze %107 : memref<1x!tpu.dma_semaphore, #tpu.memory_space<semaphore_mem>> -> memref<!tpu.dma_semaphore, #tpu.memory_space<semaphore_mem>>
    tpu.enqueue_dma source(%104 : memref<128xf32, #tpu.memory_space<any>>) target(%106 : memref<128xf32, #tpu.memory_space<vmem>>) target_semaphore(%108 : memref<!tpu.dma_semaphore, #tpu.memory_space<semaphore_mem>>)
    %c12_i32 = arith.constant 12 : i32
    %109 = arith.addi %0, %c12_i32 : i32
    %110 = arith.index_cast %109 : i32 to index
    %111 = memref.load %arg1[%110] : memref<16xi32, #tpu.memory_space<smem>>
    %c12_i32_48 = arith.constant 12 : i32
    %c12_i32_49 = arith.constant 12 : i32
    %c0_i32_50 = arith.constant 0 : i32
    %112 = tpu.memref_slice %arg2[%111, %c0_i32_50] : memref<256x128xf32, #tpu.memory_space<any>> -> memref<1x128xf32, #tpu.memory_space<any>>
    %113 = tpu.memref_squeeze %112 : memref<1x128xf32, #tpu.memory_space<any>> -> memref<128xf32, #tpu.memory_space<any>>
    %c0_i32_51 = arith.constant 0 : i32
    %114 = tpu.memref_slice %arg5[%c12_i32_48, %c0_i32_51] : memref<16x128xf32, #tpu.memory_space<vmem>> -> memref<1x128xf32, #tpu.memory_space<vmem>>
    %115 = tpu.memref_squeeze %114 : memref<1x128xf32, #tpu.memory_space<vmem>> -> memref<128xf32, #tpu.memory_space<vmem>>
    %116 = tpu.memref_slice %arg6[%c12_i32_49] : memref<16x!tpu.dma_semaphore, #tpu.memory_space<semaphore_mem>> -> memref<1x!tpu.dma_semaphore, #tpu.memory_space<semaphore_mem>>
    %117 = tpu.memref_squeeze %116 : memref<1x!tpu.dma_semaphore, #tpu.memory_space<semaphore_mem>> -> memref<!tpu.dma_semaphore, #tpu.memory_space<semaphore_mem>>
    tpu.enqueue_dma source(%113 : memref<128xf32, #tpu.memory_space<any>>) target(%115 : memref<128xf32, #tpu.memory_space<vmem>>) target_semaphore(%117 : memref<!tpu.dma_semaphore, #tpu.memory_space<semaphore_mem>>)
    %c13_i32 = arith.constant 13 : i32
    %118 = arith.addi %0, %c13_i32 : i32
    %119 = arith.index_cast %118 : i32 to index
    %120 = memref.load %arg1[%119] : memref<16xi32, #tpu.memory_space<smem>>
    %c13_i32_52 = arith.constant 13 : i32
    %c13_i32_53 = arith.constant 13 : i32
    %c0_i32_54 = arith.constant 0 : i32
    %121 = tpu.memref_slice %arg2[%120, %c0_i32_54] : memref<256x128xf32, #tpu.memory_space<any>> -> memref<1x128xf32, #tpu.memory_space<any>>
    %122 = tpu.memref_squeeze %121 : memref<1x128xf32, #tpu.memory_space<any>> -> memref<128xf32, #tpu.memory_space<any>>
    %c0_i32_55 = arith.constant 0 : i32
    %123 = tpu.memref_slice %arg5[%c13_i32_52, %c0_i32_55] : memref<16x128xf32, #tpu.memory_space<vmem>> -> memref<1x128xf32, #tpu.memory_space<vmem>>
    %124 = tpu.memref_squeeze %123 : memref<1x128xf32, #tpu.memory_space<vmem>> -> memref<128xf32, #tpu.memory_space<vmem>>
    %125 = tpu.memref_slice %arg6[%c13_i32_53] : memref<16x!tpu.dma_semaphore, #tpu.memory_space<semaphore_mem>> -> memref<1x!tpu.dma_semaphore, #tpu.memory_space<semaphore_mem>>
    %126 = tpu.memref_squeeze %125 : memref<1x!tpu.dma_semaphore, #tpu.memory_space<semaphore_mem>> -> memref<!tpu.dma_semaphore, #tpu.memory_space<semaphore_mem>>
    tpu.enqueue_dma source(%122 : memref<128xf32, #tpu.memory_space<any>>) target(%124 : memref<128xf32, #tpu.memory_space<vmem>>) target_semaphore(%126 : memref<!tpu.dma_semaphore, #tpu.memory_space<semaphore_mem>>)
    %c14_i32 = arith.constant 14 : i32
    %127 = arith.addi %0, %c14_i32 : i32
    %128 = arith.index_cast %127 : i32 to index
    %129 = memref.load %arg1[%128] : memref<16xi32, #tpu.memory_space<smem>>
    %c14_i32_56 = arith.constant 14 : i32
    %c14_i32_57 = arith.constant 14 : i32
    %c0_i32_58 = arith.constant 0 : i32
    %130 = tpu.memref_slice %arg2[%129, %c0_i32_58] : memref<256x128xf32, #tpu.memory_space<any>> -> memref<1x128xf32, #tpu.memory_space<any>>
    %131 = tpu.memref_squeeze %130 : memref<1x128xf32, #tpu.memory_space<any>> -> memref<128xf32, #tpu.memory_space<any>>
    %c0_i32_59 = arith.constant 0 : i32
    %132 = tpu.memref_slice %arg5[%c14_i32_56, %c0_i32_59] : memref<16x128xf32, #tpu.memory_space<vmem>> -> memref<1x128xf32, #tpu.memory_space<vmem>>
    %133 = tpu.memref_squeeze %132 : memref<1x128xf32, #tpu.memory_space<vmem>> -> memref<128xf32, #tpu.memory_space<vmem>>
    %134 = tpu.memref_slice %arg6[%c14_i32_57] : memref<16x!tpu.dma_semaphore, #tpu.memory_space<semaphore_mem>> -> memref<1x!tpu.dma_semaphore, #tpu.memory_space<semaphore_mem>>
    %135 = tpu.memref_squeeze %134 : memref<1x!tpu.dma_semaphore, #tpu.memory_space<semaphore_mem>> -> memref<!tpu.dma_semaphore, #tpu.memory_space<semaphore_mem>>
    tpu.enqueue_dma source(%131 : memref<128xf32, #tpu.memory_space<any>>) target(%133 : memref<128xf32, #tpu.memory_space<vmem>>) target_semaphore(%135 : memref<!tpu.dma_semaphore, #tpu.memory_space<semaphore_mem>>)
    %c15_i32 = arith.constant 15 : i32
    %136 = arith.addi %0, %c15_i32 : i32
    %137 = arith.index_cast %136 : i32 to index
    %138 = memref.load %arg1[%137] : memref<16xi32, #tpu.memory_space<smem>>
    %c15_i32_60 = arith.constant 15 : i32
    %c15_i32_61 = arith.constant 15 : i32
    %c0_i32_62 = arith.constant 0 : i32
    %139 = tpu.memref_slice %arg2[%138, %c0_i32_62] : memref<256x128xf32, #tpu.memory_space<any>> -> memref<1x128xf32, #tpu.memory_space<any>>
    %140 = tpu.memref_squeeze %139 : memref<1x128xf32, #tpu.memory_space<any>> -> memref<128xf32, #tpu.memory_space<any>>
    %c0_i32_63 = arith.constant 0 : i32
    %141 = tpu.memref_slice %arg5[%c15_i32_60, %c0_i32_63] : memref<16x128xf32, #tpu.memory_space<vmem>> -> memref<1x128xf32, #tpu.memory_space<vmem>>
    %142 = tpu.memref_squeeze %141 : memref<1x128xf32, #tpu.memory_space<vmem>> -> memref<128xf32, #tpu.memory_space<vmem>>
    %143 = tpu.memref_slice %arg6[%c15_i32_61] : memref<16x!tpu.dma_semaphore, #tpu.memory_space<semaphore_mem>> -> memref<1x!tpu.dma_semaphore, #tpu.memory_space<semaphore_mem>>
    %144 = tpu.memref_squeeze %143 : memref<1x!tpu.dma_semaphore, #tpu.memory_space<semaphore_mem>> -> memref<!tpu.dma_semaphore, #tpu.memory_space<semaphore_mem>>
    tpu.enqueue_dma source(%140 : memref<128xf32, #tpu.memory_space<any>>) target(%142 : memref<128xf32, #tpu.memory_space<vmem>>) target_semaphore(%144 : memref<!tpu.dma_semaphore, #tpu.memory_space<semaphore_mem>>)
    %c0_i32_64 = arith.constant 0 : i32
    %c0_i32_65 = arith.constant 0 : i32
    %c0_i32_66 = arith.constant 0 : i32
    %145 = tpu.memref_slice %arg2[%3, %c0_i32_66] : memref<256x128xf32, #tpu.memory_space<any>> -> memref<1x128xf32, #tpu.memory_space<any>>
    %146 = tpu.memref_squeeze %145 : memref<1x128xf32, #tpu.memory_space<any>> -> memref<128xf32, #tpu.memory_space<any>>
    %c0_i32_67 = arith.constant 0 : i32
    %147 = tpu.memref_slice %arg5[%c0_i32_64, %c0_i32_67] : memref<16x128xf32, #tpu.memory_space<vmem>> -> memref<1x128xf32, #tpu.memory_space<vmem>>
    %148 = tpu.memref_squeeze %147 : memref<1x128xf32, #tpu.memory_space<vmem>> -> memref<128xf32, #tpu.memory_space<vmem>>
    %149 = tpu.memref_slice %arg6[%c0_i32_65] : memref<16x!tpu.dma_semaphore, #tpu.memory_space<semaphore_mem>> -> memref<1x!tpu.dma_semaphore, #tpu.memory_space<semaphore_mem>>
    %150 = tpu.memref_squeeze %149 : memref<1x!tpu.dma_semaphore, #tpu.memory_space<semaphore_mem>> -> memref<!tpu.dma_semaphore, #tpu.memory_space<semaphore_mem>>
    tpu.wait_dma2 semaphore(%150 : memref<!tpu.dma_semaphore, #tpu.memory_space<semaphore_mem>>) src(%146 : memref<128xf32, #tpu.memory_space<any>>) dst(%148 : memref<128xf32, #tpu.memory_space<vmem>>)
    %c1_i32_68 = arith.constant 1 : i32
    %c1_i32_69 = arith.constant 1 : i32
    %c0_i32_70 = arith.constant 0 : i32
    %151 = tpu.memref_slice %arg2[%12, %c0_i32_70] : memref<256x128xf32, #tpu.memory_space<any>> -> memref<1x128xf32, #tpu.memory_space<any>>
    %152 = tpu.memref_squeeze %151 : memref<1x128xf32, #tpu.memory_space<any>> -> memref<128xf32, #tpu.memory_space<any>>
    %c0_i32_71 = arith.constant 0 : i32
    %153 = tpu.memref_slice %arg5[%c1_i32_68, %c0_i32_71] : memref<16x128xf32, #tpu.memory_space<vmem>> -> memref<1x128xf32, #tpu.memory_space<vmem>>
    %154 = tpu.memref_squeeze %153 : memref<1x128xf32, #tpu.memory_space<vmem>> -> memref<128xf32, #tpu.memory_space<vmem>>
    %155 = tpu.memref_slice %arg6[%c1_i32_69] : memref<16x!tpu.dma_semaphore, #tpu.memory_space<semaphore_mem>> -> memref<1x!tpu.dma_semaphore, #tpu.memory_space<semaphore_mem>>
    %156 = tpu.memref_squeeze %155 : memref<1x!tpu.dma_semaphore, #tpu.memory_space<semaphore_mem>> -> memref<!tpu.dma_semaphore, #tpu.memory_space<semaphore_mem>>
    tpu.wait_dma2 semaphore(%156 : memref<!tpu.dma_semaphore, #tpu.memory_space<semaphore_mem>>) src(%152 : memref<128xf32, #tpu.memory_space<any>>) dst(%154 : memref<128xf32, #tpu.memory_space<vmem>>)
    %c2_i32_72 = arith.constant 2 : i32
    %c2_i32_73 = arith.constant 2 : i32
    %c0_i32_74 = arith.constant 0 : i32
    %157 = tpu.memref_slice %arg2[%21, %c0_i32_74] : memref<256x128xf32, #tpu.memory_space<any>> -> memref<1x128xf32, #tpu.memory_space<any>>
    %158 = tpu.memref_squeeze %157 : memref<1x128xf32, #tpu.memory_space<any>> -> memref<128xf32, #tpu.memory_space<any>>
    %c0_i32_75 = arith.constant 0 : i32
    %159 = tpu.memref_slice %arg5[%c2_i32_72, %c0_i32_75] : memref<16x128xf32, #tpu.memory_space<vmem>> -> memref<1x128xf32, #tpu.memory_space<vmem>>
    %160 = tpu.memref_squeeze %159 : memref<1x128xf32, #tpu.memory_space<vmem>> -> memref<128xf32, #tpu.memory_space<vmem>>
    %161 = tpu.memref_slice %arg6[%c2_i32_73] : memref<16x!tpu.dma_semaphore, #tpu.memory_space<semaphore_mem>> -> memref<1x!tpu.dma_semaphore, #tpu.memory_space<semaphore_mem>>
    %162 = tpu.memref_squeeze %161 : memref<1x!tpu.dma_semaphore, #tpu.memory_space<semaphore_mem>> -> memref<!tpu.dma_semaphore, #tpu.memory_space<semaphore_mem>>
    tpu.wait_dma2 semaphore(%162 : memref<!tpu.dma_semaphore, #tpu.memory_space<semaphore_mem>>) src(%158 : memref<128xf32, #tpu.memory_space<any>>) dst(%160 : memref<128xf32, #tpu.memory_space<vmem>>)
    %c3_i32_76 = arith.constant 3 : i32
    %c3_i32_77 = arith.constant 3 : i32
    %c0_i32_78 = arith.constant 0 : i32
    %163 = tpu.memref_slice %arg2[%30, %c0_i32_78] : memref<256x128xf32, #tpu.memory_space<any>> -> memref<1x128xf32, #tpu.memory_space<any>>
    %164 = tpu.memref_squeeze %163 : memref<1x128xf32, #tpu.memory_space<any>> -> memref<128xf32, #tpu.memory_space<any>>
    %c0_i32_79 = arith.constant 0 : i32
    %165 = tpu.memref_slice %arg5[%c3_i32_76, %c0_i32_79] : memref<16x128xf32, #tpu.memory_space<vmem>> -> memref<1x128xf32, #tpu.memory_space<vmem>>
    %166 = tpu.memref_squeeze %165 : memref<1x128xf32, #tpu.memory_space<vmem>> -> memref<128xf32, #tpu.memory_space<vmem>>
    %167 = tpu.memref_slice %arg6[%c3_i32_77] : memref<16x!tpu.dma_semaphore, #tpu.memory_space<semaphore_mem>> -> memref<1x!tpu.dma_semaphore, #tpu.memory_space<semaphore_mem>>
    %168 = tpu.memref_squeeze %167 : memref<1x!tpu.dma_semaphore, #tpu.memory_space<semaphore_mem>> -> memref<!tpu.dma_semaphore, #tpu.memory_space<semaphore_mem>>
    tpu.wait_dma2 semaphore(%168 : memref<!tpu.dma_semaphore, #tpu.memory_space<semaphore_mem>>) src(%164 : memref<128xf32, #tpu.memory_space<any>>) dst(%166 : memref<128xf32, #tpu.memory_space<vmem>>)
    %c4_i32_80 = arith.constant 4 : i32
    %c4_i32_81 = arith.constant 4 : i32
    %c0_i32_82 = arith.constant 0 : i32
    %169 = tpu.memref_slice %arg2[%39, %c0_i32_82] : memref<256x128xf32, #tpu.memory_space<any>> -> memref<1x128xf32, #tpu.memory_space<any>>
    %170 = tpu.memref_squeeze %169 : memref<1x128xf32, #tpu.memory_space<any>> -> memref<128xf32, #tpu.memory_space<any>>
    %c0_i32_83 = arith.constant 0 : i32
    %171 = tpu.memref_slice %arg5[%c4_i32_80, %c0_i32_83] : memref<16x128xf32, #tpu.memory_space<vmem>> -> memref<1x128xf32, #tpu.memory_space<vmem>>
    %172 = tpu.memref_squeeze %171 : memref<1x128xf32, #tpu.memory_space<vmem>> -> memref<128xf32, #tpu.memory_space<vmem>>
    %173 = tpu.memref_slice %arg6[%c4_i32_81] : memref<16x!tpu.dma_semaphore, #tpu.memory_space<semaphore_mem>> -> memref<1x!tpu.dma_semaphore, #tpu.memory_space<semaphore_mem>>
    %174 = tpu.memref_squeeze %173 : memref<1x!tpu.dma_semaphore, #tpu.memory_space<semaphore_mem>> -> memref<!tpu.dma_semaphore, #tpu.memory_space<semaphore_mem>>
    tpu.wait_dma2 semaphore(%174 : memref<!tpu.dma_semaphore, #tpu.memory_space<semaphore_mem>>) src(%170 : memref<128xf32, #tpu.memory_space<any>>) dst(%172 : memref<128xf32, #tpu.memory_space<vmem>>)
    %c5_i32_84 = arith.constant 5 : i32
    %c5_i32_85 = arith.constant 5 : i32
    %c0_i32_86 = arith.constant 0 : i32
    %175 = tpu.memref_slice %arg2[%48, %c0_i32_86] : memref<256x128xf32, #tpu.memory_space<any>> -> memref<1x128xf32, #tpu.memory_space<any>>
    %176 = tpu.memref_squeeze %175 : memref<1x128xf32, #tpu.memory_space<any>> -> memref<128xf32, #tpu.memory_space<any>>
    %c0_i32_87 = arith.constant 0 : i32
    %177 = tpu.memref_slice %arg5[%c5_i32_84, %c0_i32_87] : memref<16x128xf32, #tpu.memory_space<vmem>> -> memref<1x128xf32, #tpu.memory_space<vmem>>
    %178 = tpu.memref_squeeze %177 : memref<1x128xf32, #tpu.memory_space<vmem>> -> memref<128xf32, #tpu.memory_space<vmem>>
    %179 = tpu.memref_slice %arg6[%c5_i32_85] : memref<16x!tpu.dma_semaphore, #tpu.memory_space<semaphore_mem>> -> memref<1x!tpu.dma_semaphore, #tpu.memory_space<semaphore_mem>>
    %180 = tpu.memref_squeeze %179 : memref<1x!tpu.dma_semaphore, #tpu.memory_space<semaphore_mem>> -> memref<!tpu.dma_semaphore, #tpu.memory_space<semaphore_mem>>
    tpu.wait_dma2 semaphore(%180 : memref<!tpu.dma_semaphore, #tpu.memory_space<semaphore_mem>>) src(%176 : memref<128xf32, #tpu.memory_space<any>>) dst(%178 : memref<128xf32, #tpu.memory_space<vmem>>)
    %c6_i32_88 = arith.constant 6 : i32
    %c6_i32_89 = arith.constant 6 : i32
    %c0_i32_90 = arith.constant 0 : i32
    %181 = tpu.memref_slice %arg2[%57, %c0_i32_90] : memref<256x128xf32, #tpu.memory_space<any>> -> memref<1x128xf32, #tpu.memory_space<any>>
    %182 = tpu.memref_squeeze %181 : memref<1x128xf32, #tpu.memory_space<any>> -> memref<128xf32, #tpu.memory_space<any>>
    %c0_i32_91 = arith.constant 0 : i32
    %183 = tpu.memref_slice %arg5[%c6_i32_88, %c0_i32_91] : memref<16x128xf32, #tpu.memory_space<vmem>> -> memref<1x128xf32, #tpu.memory_space<vmem>>
    %184 = tpu.memref_squeeze %183 : memref<1x128xf32, #tpu.memory_space<vmem>> -> memref<128xf32, #tpu.memory_space<vmem>>
    %185 = tpu.memref_slice %arg6[%c6_i32_89] : memref<16x!tpu.dma_semaphore, #tpu.memory_space<semaphore_mem>> -> memref<1x!tpu.dma_semaphore, #tpu.memory_space<semaphore_mem>>
    %186 = tpu.memref_squeeze %185 : memref<1x!tpu.dma_semaphore, #tpu.memory_space<semaphore_mem>> -> memref<!tpu.dma_semaphore, #tpu.memory_space<semaphore_mem>>
    tpu.wait_dma2 semaphore(%186 : memref<!tpu.dma_semaphore, #tpu.memory_space<semaphore_mem>>) src(%182 : memref<128xf32, #tpu.memory_space<any>>) dst(%184 : memref<128xf32, #tpu.memory_space<vmem>>)
    %c7_i32_92 = arith.constant 7 : i32
    %c7_i32_93 = arith.constant 7 : i32
    %c0_i32_94 = arith.constant 0 : i32
    %187 = tpu.memref_slice %arg2[%66, %c0_i32_94] : memref<256x128xf32, #tpu.memory_space<any>> -> memref<1x128xf32, #tpu.memory_space<any>>
    %188 = tpu.memref_squeeze %187 : memref<1x128xf32, #tpu.memory_space<any>> -> memref<128xf32, #tpu.memory_space<any>>
    %c0_i32_95 = arith.constant 0 : i32
    %189 = tpu.memref_slice %arg5[%c7_i32_92, %c0_i32_95] : memref<16x128xf32, #tpu.memory_space<vmem>> -> memref<1x128xf32, #tpu.memory_space<vmem>>
    %190 = tpu.memref_squeeze %189 : memref<1x128xf32, #tpu.memory_space<vmem>> -> memref<128xf32, #tpu.memory_space<vmem>>
    %191 = tpu.memref_slice %arg6[%c7_i32_93] : memref<16x!tpu.dma_semaphore, #tpu.memory_space<semaphore_mem>> -> memref<1x!tpu.dma_semaphore, #tpu.memory_space<semaphore_mem>>
    %192 = tpu.memref_squeeze %191 : memref<1x!tpu.dma_semaphore, #tpu.memory_space<semaphore_mem>> -> memref<!tpu.dma_semaphore, #tpu.memory_space<semaphore_mem>>
    tpu.wait_dma2 semaphore(%192 : memref<!tpu.dma_semaphore, #tpu.memory_space<semaphore_mem>>) src(%188 : memref<128xf32, #tpu.memory_space<any>>) dst(%190 : memref<128xf32, #tpu.memory_space<vmem>>)
    %c8_i32_96 = arith.constant 8 : i32
    %c8_i32_97 = arith.constant 8 : i32
    %c0_i32_98 = arith.constant 0 : i32
    %193 = tpu.memref_slice %arg2[%75, %c0_i32_98] : memref<256x128xf32, #tpu.memory_space<any>> -> memref<1x128xf32, #tpu.memory_space<any>>
    %194 = tpu.memref_squeeze %193 : memref<1x128xf32, #tpu.memory_space<any>> -> memref<128xf32, #tpu.memory_space<any>>
    %c0_i32_99 = arith.constant 0 : i32
    %195 = tpu.memref_slice %arg5[%c8_i32_96, %c0_i32_99] : memref<16x128xf32, #tpu.memory_space<vmem>> -> memref<1x128xf32, #tpu.memory_space<vmem>>
    %196 = tpu.memref_squeeze %195 : memref<1x128xf32, #tpu.memory_space<vmem>> -> memref<128xf32, #tpu.memory_space<vmem>>
    %197 = tpu.memref_slice %arg6[%c8_i32_97] : memref<16x!tpu.dma_semaphore, #tpu.memory_space<semaphore_mem>> -> memref<1x!tpu.dma_semaphore, #tpu.memory_space<semaphore_mem>>
    %198 = tpu.memref_squeeze %197 : memref<1x!tpu.dma_semaphore, #tpu.memory_space<semaphore_mem>> -> memref<!tpu.dma_semaphore, #tpu.memory_space<semaphore_mem>>
    tpu.wait_dma2 semaphore(%198 : memref<!tpu.dma_semaphore, #tpu.memory_space<semaphore_mem>>) src(%194 : memref<128xf32, #tpu.memory_space<any>>) dst(%196 : memref<128xf32, #tpu.memory_space<vmem>>)
    %c9_i32_100 = arith.constant 9 : i32
    %c9_i32_101 = arith.constant 9 : i32
    %c0_i32_102 = arith.constant 0 : i32
    %199 = tpu.memref_slice %arg2[%84, %c0_i32_102] : memref<256x128xf32, #tpu.memory_space<any>> -> memref<1x128xf32, #tpu.memory_space<any>>
    %200 = tpu.memref_squeeze %199 : memref<1x128xf32, #tpu.memory_space<any>> -> memref<128xf32, #tpu.memory_space<any>>
    %c0_i32_103 = arith.constant 0 : i32
    %201 = tpu.memref_slice %arg5[%c9_i32_100, %c0_i32_103] : memref<16x128xf32, #tpu.memory_space<vmem>> -> memref<1x128xf32, #tpu.memory_space<vmem>>
    %202 = tpu.memref_squeeze %201 : memref<1x128xf32, #tpu.memory_space<vmem>> -> memref<128xf32, #tpu.memory_space<vmem>>
    %203 = tpu.memref_slice %arg6[%c9_i32_101] : memref<16x!tpu.dma_semaphore, #tpu.memory_space<semaphore_mem>> -> memref<1x!tpu.dma_semaphore, #tpu.memory_space<semaphore_mem>>
    %204 = tpu.memref_squeeze %203 : memref<1x!tpu.dma_semaphore, #tpu.memory_space<semaphore_mem>> -> memref<!tpu.dma_semaphore, #tpu.memory_space<semaphore_mem>>
    tpu.wait_dma2 semaphore(%204 : memref<!tpu.dma_semaphore, #tpu.memory_space<semaphore_mem>>) src(%200 : memref<128xf32, #tpu.memory_space<any>>) dst(%202 : memref<128xf32, #tpu.memory_space<vmem>>)
    %c10_i32_104 = arith.constant 10 : i32
    %c10_i32_105 = arith.constant 10 : i32
    %c0_i32_106 = arith.constant 0 : i32
    %205 = tpu.memref_slice %arg2[%93, %c0_i32_106] : memref<256x128xf32, #tpu.memory_space<any>> -> memref<1x128xf32, #tpu.memory_space<any>>
    %206 = tpu.memref_squeeze %205 : memref<1x128xf32, #tpu.memory_space<any>> -> memref<128xf32, #tpu.memory_space<any>>
    %c0_i32_107 = arith.constant 0 : i32
    %207 = tpu.memref_slice %arg5[%c10_i32_104, %c0_i32_107] : memref<16x128xf32, #tpu.memory_space<vmem>> -> memref<1x128xf32, #tpu.memory_space<vmem>>
    %208 = tpu.memref_squeeze %207 : memref<1x128xf32, #tpu.memory_space<vmem>> -> memref<128xf32, #tpu.memory_space<vmem>>
    %209 = tpu.memref_slice %arg6[%c10_i32_105] : memref<16x!tpu.dma_semaphore, #tpu.memory_space<semaphore_mem>> -> memref<1x!tpu.dma_semaphore, #tpu.memory_space<semaphore_mem>>
    %210 = tpu.memref_squeeze %209 : memref<1x!tpu.dma_semaphore, #tpu.memory_space<semaphore_mem>> -> memref<!tpu.dma_semaphore, #tpu.memory_space<semaphore_mem>>
    tpu.wait_dma2 semaphore(%210 : memref<!tpu.dma_semaphore, #tpu.memory_space<semaphore_mem>>) src(%206 : memref<128xf32, #tpu.memory_space<any>>) dst(%208 : memref<128xf32, #tpu.memory_space<vmem>>)
    %c11_i32_108 = arith.constant 11 : i32
    %c11_i32_109 = arith.constant 11 : i32
    %c0_i32_110 = arith.constant 0 : i32
    %211 = tpu.memref_slice %arg2[%102, %c0_i32_110] : memref<256x128xf32, #tpu.memory_space<any>> -> memref<1x128xf32, #tpu.memory_space<any>>
    %212 = tpu.memref_squeeze %211 : memref<1x128xf32, #tpu.memory_space<any>> -> memref<128xf32, #tpu.memory_space<any>>
    %c0_i32_111 = arith.constant 0 : i32
    %213 = tpu.memref_slice %arg5[%c11_i32_108, %c0_i32_111] : memref<16x128xf32, #tpu.memory_space<vmem>> -> memref<1x128xf32, #tpu.memory_space<vmem>>
    %214 = tpu.memref_squeeze %213 : memref<1x128xf32, #tpu.memory_space<vmem>> -> memref<128xf32, #tpu.memory_space<vmem>>
    %215 = tpu.memref_slice %arg6[%c11_i32_109] : memref<16x!tpu.dma_semaphore, #tpu.memory_space<semaphore_mem>> -> memref<1x!tpu.dma_semaphore, #tpu.memory_space<semaphore_mem>>
    %216 = tpu.memref_squeeze %215 : memref<1x!tpu.dma_semaphore, #tpu.memory_space<semaphore_mem>> -> memref<!tpu.dma_semaphore, #tpu.memory_space<semaphore_mem>>
    tpu.wait_dma2 semaphore(%216 : memref<!tpu.dma_semaphore, #tpu.memory_space<semaphore_mem>>) src(%212 : memref<128xf32, #tpu.memory_space<any>>) dst(%214 : memref<128xf32, #tpu.memory_space<vmem>>)
    %c12_i32_112 = arith.constant 12 : i32
    %c12_i32_113 = arith.constant 12 : i32
    %c0_i32_114 = arith.constant 0 : i32
    %217 = tpu.memref_slice %arg2[%111, %c0_i32_114] : memref<256x128xf32, #tpu.memory_space<any>> -> memref<1x128xf32, #tpu.memory_space<any>>
    %218 = tpu.memref_squeeze %217 : memref<1x128xf32, #tpu.memory_space<any>> -> memref<128xf32, #tpu.memory_space<any>>
    %c0_i32_115 = arith.constant 0 : i32
    %219 = tpu.memref_slice %arg5[%c12_i32_112, %c0_i32_115] : memref<16x128xf32, #tpu.memory_space<vmem>> -> memref<1x128xf32, #tpu.memory_space<vmem>>
    %220 = tpu.memref_squeeze %219 : memref<1x128xf32, #tpu.memory_space<vmem>> -> memref<128xf32, #tpu.memory_space<vmem>>
    %221 = tpu.memref_slice %arg6[%c12_i32_113] : memref<16x!tpu.dma_semaphore, #tpu.memory_space<semaphore_mem>> -> memref<1x!tpu.dma_semaphore, #tpu.memory_space<semaphore_mem>>
    %222 = tpu.memref_squeeze %221 : memref<1x!tpu.dma_semaphore, #tpu.memory_space<semaphore_mem>> -> memref<!tpu.dma_semaphore, #tpu.memory_space<semaphore_mem>>
    tpu.wait_dma2 semaphore(%222 : memref<!tpu.dma_semaphore, #tpu.memory_space<semaphore_mem>>) src(%218 : memref<128xf32, #tpu.memory_space<any>>) dst(%220 : memref<128xf32, #tpu.memory_space<vmem>>)
    %c13_i32_116 = arith.constant 13 : i32
    %c13_i32_117 = arith.constant 13 : i32
    %c0_i32_118 = arith.constant 0 : i32
    %223 = tpu.memref_slice %arg2[%120, %c0_i32_118] : memref<256x128xf32, #tpu.memory_space<any>> -> memref<1x128xf32, #tpu.memory_space<any>>
    %224 = tpu.memref_squeeze %223 : memref<1x128xf32, #tpu.memory_space<any>> -> memref<128xf32, #tpu.memory_space<any>>
    %c0_i32_119 = arith.constant 0 : i32
    %225 = tpu.memref_slice %arg5[%c13_i32_116, %c0_i32_119] : memref<16x128xf32, #tpu.memory_space<vmem>> -> memref<1x128xf32, #tpu.memory_space<vmem>>
    %226 = tpu.memref_squeeze %225 : memref<1x128xf32, #tpu.memory_space<vmem>> -> memref<128xf32, #tpu.memory_space<vmem>>
    %227 = tpu.memref_slice %arg6[%c13_i32_117] : memref<16x!tpu.dma_semaphore, #tpu.memory_space<semaphore_mem>> -> memref<1x!tpu.dma_semaphore, #tpu.memory_space<semaphore_mem>>
    %228 = tpu.memref_squeeze %227 : memref<1x!tpu.dma_semaphore, #tpu.memory_space<semaphore_mem>> -> memref<!tpu.dma_semaphore, #tpu.memory_space<semaphore_mem>>
    tpu.wait_dma2 semaphore(%228 : memref<!tpu.dma_semaphore, #tpu.memory_space<semaphore_mem>>) src(%224 : memref<128xf32, #tpu.memory_space<any>>) dst(%226 : memref<128xf32, #tpu.memory_space<vmem>>)
    %c14_i32_120 = arith.constant 14 : i32
    %c14_i32_121 = arith.constant 14 : i32
    %c0_i32_122 = arith.constant 0 : i32
    %229 = tpu.memref_slice %arg2[%129, %c0_i32_122] : memref<256x128xf32, #tpu.memory_space<any>> -> memref<1x128xf32, #tpu.memory_space<any>>
    %230 = tpu.memref_squeeze %229 : memref<1x128xf32, #tpu.memory_space<any>> -> memref<128xf32, #tpu.memory_space<any>>
    %c0_i32_123 = arith.constant 0 : i32
    %231 = tpu.memref_slice %arg5[%c14_i32_120, %c0_i32_123] : memref<16x128xf32, #tpu.memory_space<vmem>> -> memref<1x128xf32, #tpu.memory_space<vmem>>
    %232 = tpu.memref_squeeze %231 : memref<1x128xf32, #tpu.memory_space<vmem>> -> memref<128xf32, #tpu.memory_space<vmem>>
    %233 = tpu.memref_slice %arg6[%c14_i32_121] : memref<16x!tpu.dma_semaphore, #tpu.memory_space<semaphore_mem>> -> memref<1x!tpu.dma_semaphore, #tpu.memory_space<semaphore_mem>>
    %234 = tpu.memref_squeeze %233 : memref<1x!tpu.dma_semaphore, #tpu.memory_space<semaphore_mem>> -> memref<!tpu.dma_semaphore, #tpu.memory_space<semaphore_mem>>
    tpu.wait_dma2 semaphore(%234 : memref<!tpu.dma_semaphore, #tpu.memory_space<semaphore_mem>>) src(%230 : memref<128xf32, #tpu.memory_space<any>>) dst(%232 : memref<128xf32, #tpu.memory_space<vmem>>)
    %c15_i32_124 = arith.constant 15 : i32
    %c15_i32_125 = arith.constant 15 : i32
    %c0_i32_126 = arith.constant 0 : i32
    %235 = tpu.memref_slice %arg2[%138, %c0_i32_126] : memref<256x128xf32, #tpu.memory_space<any>> -> memref<1x128xf32, #tpu.memory_space<any>>
    %236 = tpu.memref_squeeze %235 : memref<1x128xf32, #tpu.memory_space<any>> -> memref<128xf32, #tpu.memory_space<any>>
    %c0_i32_127 = arith.constant 0 : i32
    %237 = tpu.memref_slice %arg5[%c15_i32_124, %c0_i32_127] : memref<16x128xf32, #tpu.memory_space<vmem>> -> memref<1x128xf32, #tpu.memory_space<vmem>>
    %238 = tpu.memref_squeeze %237 : memref<1x128xf32, #tpu.memory_space<vmem>> -> memref<128xf32, #tpu.memory_space<vmem>>
    %239 = tpu.memref_slice %arg6[%c15_i32_125] : memref<16x!tpu.dma_semaphore, #tpu.memory_space<semaphore_mem>> -> memref<1x!tpu.dma_semaphore, #tpu.memory_space<semaphore_mem>>
    %240 = tpu.memref_squeeze %239 : memref<1x!tpu.dma_semaphore, #tpu.memory_space<semaphore_mem>> -> memref<!tpu.dma_semaphore, #tpu.memory_space<semaphore_mem>>
    tpu.wait_dma2 semaphore(%240 : memref<!tpu.dma_semaphore, #tpu.memory_space<semaphore_mem>>) src(%236 : memref<128xf32, #tpu.memory_space<any>>) dst(%238 : memref<128xf32, #tpu.memory_space<vmem>>)
    %c0 = arith.constant 0 : index
    %c0_128 = arith.constant 0 : index
    %241 = vector.load %arg5[%c0, %c0_128] : memref<16x128xf32, #tpu.memory_space<vmem>>, vector<16x128xf32>
    %c0_129 = arith.constant 0 : index
    %c0_130 = arith.constant 0 : index
    %242 = vector.load %arg3[%c0_129, %c0_130] : memref<16x128xf32, #tpu.memory_space<vmem>>, vector<16x128xf32>
    tpu.vector_store %arg3[%c0_129, %c0_130], %241 {strides = array<i32>} : memref<16x128xf32, #tpu.memory_space<vmem>>, vector<16x128xf32>,
    %243 = arith.truncf %241 : vector<16x128xf32> to vector<16x128xbf16>
    %c0_131 = arith.constant 0 : index
    %c0_132 = arith.constant 0 : index
    %244 = vector.load %arg4[%c0_131, %c0_132] : memref<16x128xbf16, #tpu.memory_space<vmem>>, vector<16x128xbf16>
    tpu.vector_store %arg4[%c0_131, %c0_132], %243 {strides = array<i32>} : memref<16x128xbf16, #tpu.memory_space<vmem>>, vector<16x128xbf16>,
    return
  }
  func.func @transform_1(%arg0: i32, %arg1: memref<16xi32, #tpu.memory_space<smem>>) -> (i32, i32) {
    %c0_i32 = arith.constant 0 : i32
    %c0_i32_0 = arith.constant 0 : i32
    return %arg0, %c0_i32 : i32, i32
  }
  func.func @transform_2(%arg0: i32, %arg1: memref<16xi32, #tpu.memory_space<smem>>) -> (i32, i32) {
    %c0_i32 = arith.constant 0 : i32
    %c0_i32_0 = arith.constant 0 : i32
    return %arg0, %c0_i32 : i32, i32
  }
}

module attributes {stable_mosaic.version = 11 : i64} {
  func.func @_lm_head_kernel(%arg0: i32, %arg1: i32, %arg2: i32, %arg3: memref<256x128xbf16, #tpu.memory_space<vmem>>, %arg4: memref<128x256xbf16, #tpu.memory_space<vmem>>, %arg5: memref<256x256xf32, #tpu.memory_space<vmem>>) attributes {dimension_semantics = [#tpu.dimension_semantics<parallel>, #tpu.dimension_semantics<parallel>, #tpu.dimension_semantics<arbitrary>], iteration_bounds = array<i64: 1, 1, 1>, scalar_prefetch = 0 : i64, scratch_operands = 0 : i64, tpu.core_type = #tpu.core_type<tc>, window_params = [{transform_indices = @transform_0, window_bounds = array<i64: 256, 128>}, {transform_indices = @transform_1, window_bounds = array<i64: 128, 256>}, {transform_indices = @transform_2, window_bounds = array<i64: 256, 256>}]} {
    %c0_i32 = arith.constant 0 : i32
    %0 = arith.cmpi eq, %arg2, %c0_i32 : i32
    %1 = arith.extui %0 : i1 to i32
    %c0_i32_0 = arith.constant 0 : i32
    %2 = arith.cmpi ne, %1, %c0_i32_0 : i32
    scf.if %2 {
      %cst_7 = arith.constant 0.000000e+00 : f32
      %12 = vector.broadcast %cst_7 : f32 to vector<256x256xf32>
      %c0_8 = arith.constant 0 : index
      %c0_9 = arith.constant 0 : index
      %13 = vector.load %arg5[%c0_8, %c0_9] : memref<256x256xf32, #tpu.memory_space<vmem>>, vector<256x256xf32>
      tpu.vector_store %arg5[%c0_8, %c0_9], %12 {strides = array<i32>} : memref<256x256xf32, #tpu.memory_space<vmem>>, vector<256x256xf32>,
    } else {
    }
    %c128_i32 = arith.constant 128 : i32
    %3 = arith.muli %arg2, %c128_i32 : i32
    %4 = tpu.assume_multiple %3, 128 : i32
    %c0 = arith.constant 0 : index
    %c0_1 = arith.constant 0 : index
    %5 = vector.load %arg5[%c0, %c0_1] : memref<256x256xf32, #tpu.memory_space<vmem>>, vector<256x256xf32>
    %c0_2 = arith.constant 0 : index
    %6 = arith.index_cast %4 : i32 to index
    %7 = vector.load %arg3[%c0_2, %6] : memref<256x128xbf16, #tpu.memory_space<vmem>>, vector<256x128xbf16>
    %c0_3 = arith.constant 0 : index
    %c0_4 = arith.constant 0 : index
    %8 = vector.load %arg4[%c0_3, %c0_4] : memref<128x256xbf16, #tpu.memory_space<vmem>>, vector<128x256xbf16>
    %cst = arith.constant dense<0.000000e+00> : vector<256x256xf32>
    %9 = tpu.matmul %7, %8, %cst {dimension_numbers = #tpu.dot_dimension_numbers<[1], [0], [0], [1], [0, 0, 1, 1], [], []>} : vector<256x128xbf16>, vector<128x256xbf16>, vector<256x256xf32> -> vector<256x256xf32>
    %10 = arith.addf %5, %9 : vector<256x256xf32>
    %c0_5 = arith.constant 0 : index
    %c0_6 = arith.constant 0 : index
    %11 = vector.load %arg5[%c0_5, %c0_6] : memref<256x256xf32, #tpu.memory_space<vmem>>, vector<256x256xf32>
    tpu.vector_store %arg5[%c0_5, %c0_6], %10 {strides = array<i32>} : memref<256x256xf32, #tpu.memory_space<vmem>>, vector<256x256xf32>,
    return
  }
  func.func @transform_0(%arg0: i32, %arg1: i32, %arg2: i32) -> (i32, i32) {
    %c0_i32 = arith.constant 0 : i32
    %c0_i32_0 = arith.constant 0 : i32
    return %arg0, %c0_i32 : i32, i32
  }
  func.func @transform_1(%arg0: i32, %arg1: i32, %arg2: i32) -> (i32, i32) {
    %c0_i32 = arith.constant 0 : i32
    return %arg2, %arg1 : i32, i32
  }
  func.func @transform_2(%arg0: i32, %arg1: i32, %arg2: i32) -> (i32, i32) {
    %c0_i32 = arith.constant 0 : i32
    return %arg0, %arg1 : i32, i32
  }
}

</mosaic_0001>

<llo_original>
// kernel: model_with_prompt_forward.2
$region0: #{model_with_prompt_forward.2}
  #allocation0 [shape = 'u32[]', space=smem, size = 0x4, offset = 0x4, fixed_abs, tag = 'smem constant byte address 0x4 - core index']
  #allocation1 [shape = 'u32[144,128]{1,0:T(1,128)}', space=vmem, size = 0x12000, scoped, tag = 'internal scratch']
  #allocation2 [shape = 'f32[16,128]{1,0:T(8,128)}', space=vmem, size = 0x2000, scoped, tag = 'scratch operand']
  #allocation3 [shape = 's32[16]{0}', space=sflag, size = 0x40, scoped, tag = 'scratch operand']
  #allocation4 [shape = 's32[1]{0}', space=sflag, size = 0x4, scoped, tag = 'scoped memory for model_with_prompt_forward.2']
  #allocation5 [shape = 'u8[512]{0}', space=smem, size = 0x200, scoped, tag = 'prefetched SMEM operand 0']
  #allocation6 [shape = 's32[]', space=sflag, size = 0x4, offset = 0, fixed_abs, tag = 'sflag constant byte address 0x0 - dummy sync flag']
  #allocation7 [shape = 's32[]', space=sflag, size = 0x4, offset = 0, fixed_abs, tag = 'sflag constant byte address 0x0 - dummy sync flag']
  #allocation8 [shape = 'u32[]', space=smem, size = 0x4, offset = 0x44, fixed_abs, tag = 'smem constant byte address 0x44 - assertion arg 0']
  #allocation9 [shape = 'u32[]', space=smem, size = 0x4, offset = 0x48, fixed_abs, tag = 'smem constant byte address 0x48 - assertion arg 1']
  #allocation10 [shape = 's32[]', space=sflag, size = 0x4, offset = 0, fixed_abs, tag = 'sflag constant byte address 0x0 - dummy sync flag']
  #allocation11 [shape = 's32[]', space=sflag, size = 0x4, offset = 0, fixed_abs, tag = 'sflag constant byte address 0x0 - dummy sync flag']
  #allocation12 [shape = 's32[]', space=sflag, size = 0x4, offset = 0, fixed_abs, tag = 'sflag constant byte address 0x0 - dummy sync flag']
  #allocation13 [shape = 's32[]', space=sflag, size = 0x4, offset = 0, fixed_abs, tag = 'sflag constant byte address 0x0 - dummy sync flag']
  #allocation14 [shape = 's32[]', space=sflag, size = 0x4, offset = 0, fixed_abs, tag = 'sflag constant byte address 0x0 - dummy sync flag']
  #allocation15 [shape = 's32[]', space=sflag, size = 0x4, offset = 0, fixed_abs, tag = 'sflag constant byte address 0x0 - dummy sync flag']
  #allocation16 [shape = 's32[]', space=sflag, size = 0x4, offset = 0, fixed_abs, tag = 'sflag constant byte address 0x0 - dummy sync flag']
  #allocation17 [shape = 's32[]', space=sflag, size = 0x4, offset = 0, fixed_abs, tag = 'sflag constant byte address 0x0 - dummy sync flag']
  #allocation18 [shape = 's32[]', space=sflag, size = 0x4, offset = 0, fixed_abs, tag = 'sflag constant byte address 0x0 - dummy sync flag']
  #allocation19 [shape = 's32[]', space=sflag, size = 0x4, offset = 0, fixed_abs, tag = 'sflag constant byte address 0x0 - dummy sync flag']
  #allocation20 [shape = 's32[]', space=sflag, size = 0x4, offset = 0, fixed_abs, tag = 'sflag constant byte address 0x0 - dummy sync flag']
  #allocation21 [shape = 's32[]', space=sflag, size = 0x4, offset = 0, fixed_abs, tag = 'sflag constant byte address 0x0 - dummy sync flag']
  #allocation22 [shape = 's32[]', space=sflag, size = 0x4, offset = 0, fixed_abs, tag = 'sflag constant byte address 0x0 - dummy sync flag']
  #allocation23 [shape = 's32[]', space=sflag, size = 0x4, offset = 0, fixed_abs, tag = 'sflag constant byte address 0x0 - dummy sync flag']
  #allocation24 [shape = 's32[]', space=sflag, size = 0x4, offset = 0, fixed_abs, tag = 'sflag constant byte address 0x0 - dummy sync flag']
  #allocation25 [shape = 's32[]', space=sflag, size = 0x4, offset = 0, fixed_abs, tag = 'sflag constant byte address 0x0 - dummy sync flag']
  #allocation26 [shape = 's32[]', space=sflag, size = 0x4, offset = 0, fixed_abs, tag = 'sflag constant byte address 0x0 - dummy sync flag']
  #allocation27 [shape = 's32[]', space=sflag, size = 0x4, offset = 0, fixed_abs, tag = 'sflag constant byte address 0x0 - dummy sync flag']
  #allocation28 [shape = 's32[]', space=sflag, size = 0x4, offset = 0, fixed_abs, tag = 'sflag constant byte address 0x0 - dummy sync flag']
  #allocation29 [shape = 's32[]', space=sflag, size = 0x4, offset = 0, fixed_abs, tag = 'sflag constant byte address 0x0 - dummy sync flag']
  #allocation30 [shape = 's32[]', space=sflag, size = 0x4, offset = 0, fixed_abs, tag = 'sflag constant byte address 0x0 - dummy sync flag']
  #allocation31 [shape = 's32[]', space=sflag, size = 0x4, offset = 0, fixed_abs, tag = 'sflag constant byte address 0x0 - dummy sync flag']
  #allocation32 [shape = 's32[]', space=sflag, size = 0x4, offset = 0, fixed_abs, tag = 'sflag constant byte address 0x0 - dummy sync flag']
  #allocation33 [shape = 's32[]', space=sflag, size = 0x4, offset = 0, fixed_abs, tag = 'sflag constant byte address 0x0 - dummy sync flag']
  #allocation34 [shape = 's32[]', space=sflag, size = 0x4, offset = 0, fixed_abs, tag = 'sflag constant byte address 0x0 - dummy sync flag']
  #allocation35 [shape = 's32[]', space=sflag, size = 0x4, offset = 0, fixed_abs, tag = 'sflag constant byte address 0x0 - dummy sync flag']
  #allocation36 [shape = 's32[]', space=sflag, size = 0x4, offset = 0, fixed_abs, tag = 'sflag constant byte address 0x0 - dummy sync flag']
  #allocation37 [shape = 's32[]', space=sflag, size = 0x4, offset = 0, fixed_abs, tag = 'sflag constant byte address 0x0 - dummy sync flag']
  #allocation38 [shape = 's32[]', space=sflag, size = 0x4, offset = 0, fixed_abs, tag = 'sflag constant byte address 0x0 - dummy sync flag']
  #allocation39 [shape = 's32[]', space=sflag, size = 0x4, offset = 0, fixed_abs, tag = 'sflag constant byte address 0x0 - dummy sync flag']
  %s0 = inlined_call_operand.vmem [shape: s32[16], index: 0, kind: input, shape index: {}]
  %s1 = inlined_call_operand.hbm [shape: f32[256,128], index: 1, kind: input, shape index: {}]
  %s2 = inlined_call_operand.vmem [shape: f32[16,128], index: 2, kind: output, shape index: {0}]
  %s3 = inlined_call_operand.vmem [shape: bf16[16,128], index: 3, kind: output, shape index: {1}]
  %4 = xla_tuple %s2, %s3
  %s5 = sld [smem:[#allocation0]]
  $region82: #{model_with_prompt_forward.2} parent=0
    _
  %s7 = ssub.s32 1, %s5
  %s8 = scalar_select 0, %s7, %s5
  %s9 = sshll.u32 %s0, 4
  %s10 = int_to_ptr.vmem [resolvable:$true] %s9
  %12 = dma.vmem_to_smem %s10, 16, [#allocation5], [#allocation4]
  %13 = dma.done [#allocation4], 16
  %14 = sfence
  %s15 = smul.u32 0, 16
  %s16 = sld [smem:[#allocation5 + %s15]]
  %s17 = smul.addr %s16, 16
  %s18 = scalar_lea.hbm %s1, %s17
  // Predicated region
  $region2: #{model_with_prompt_forward.2} parent=0 // pred_check
    _
  $region3: #{model_with_prompt_forward.2} parent=0 // pred_check_branch
    %20 = sbr.rel target = $region5
  $region4: #{model_with_prompt_forward.2} parent=0 // pred_region
    %21 = sst [smem:[#allocation8]] [#allocation7]
    %22 = sst [smem:[#allocation9]] [#allocation6]
  $region5: #{model_with_prompt_forward.2} parent=0 // pred_fallthru
    _
  %24 = shalt.err (0)
  %s26 = sshll.u32 [#allocation2], 4
  %s27 = int_to_ptr.vmem [resolvable:$true] %s26
  %29 = dma.hbm_to_vmem [thread:$0]  %s18, 16, %s27, [#allocation3]
  %s30 = sadd.s32 %s15, 1
  %s31 = sld [smem:[#allocation5 + %s30]]
  %s32 = smul.addr %s31, 16
  %s33 = scalar_lea.hbm %s1, %s32
  %s34 = scalar_lea.vmem [#allocation2], 1
  %s35 = scalar_lea.sflag [#allocation3], 1
  // Predicated region
  $region6: #{model_with_prompt_forward.2} parent=0 // pred_check
    _
  $region7: #{model_with_prompt_forward.2} parent=0 // pred_check_branch
    %37 = sbr.rel target = $region9
  $region8: #{model_with_prompt_forward.2} parent=0 // pred_region
    %38 = sst [smem:[#allocation8]] [#allocation11]
    %39 = sst [smem:[#allocation9]] [#allocation10]
  $region9: #{model_with_prompt_forward.2} parent=0 // pred_fallthru
    _
  %41 = shalt.err (0)
  %s43 = sshll.u32 %s34, 4
  %s44 = int_to_ptr.vmem [resolvable:$true] %s43
  %46 = dma.hbm_to_vmem [thread:$0]  %s33, 16, %s44, %s35
  %s47 = sadd.s32 %s15, 2
  %s48 = sld [smem:[#allocation5 + %s47]]
  %s49 = smul.addr %s48, 16
  %s50 = scalar_lea.hbm %s1, %s49
  %s51 = scalar_lea.vmem [#allocation2], 2
  %s52 = scalar_lea.sflag [#allocation3], 2
  // Predicated region
  $region10: #{model_with_prompt_forward.2} parent=0 // pred_check
    _
  $region11: #{model_with_prompt_forward.2} parent=0 // pred_check_branch
    %54 = sbr.rel target = $region13
  $region12: #{model_with_prompt_forward.2} parent=0 // pred_region
    %55 = sst [smem:[#allocation8]] [#allocation13]
    %56 = sst [smem:[#allocation9]] [#allocation12]
  $region13: #{model_with_prompt_forward.2} parent=0 // pred_fallthru
    _
  %58 = shalt.err (0)
  %s60 = sshll.u32 %s51, 4
  %s61 = int_to_ptr.vmem [resolvable:$true] %s60
  %63 = dma.hbm_to_vmem [thread:$0]  %s50, 16, %s61, %s52
  %s64 = sadd.s32 %s15, 3
  %s65 = sld [smem:[#allocation5 + %s64]]
  %s66 = smul.addr %s65, 16
  %s67 = scalar_lea.hbm %s1, %s66
  %s68 = scalar_lea.vmem [#allocation2], 3
  %s69 = scalar_lea.sflag [#allocation3], 3
  // Predicated region
  $region14: #{model_with_prompt_forward.2} parent=0 // pred_check
    _
  $region15: #{model_with_prompt_forward.2} parent=0 // pred_check_branch
    %71 = sbr.rel target = $region17
  $region16: #{model_with_prompt_forward.2} parent=0 // pred_region
    %72 = sst [smem:[#allocation8]] [#allocation15]
    %73 = sst [smem:[#allocation9]] [#allocation14]
  $region17: #{model_with_prompt_forward.2} parent=0 // pred_fallthru
    _
  %75 = shalt.err (0)
  %s77 = sshll.u32 %s68, 4
  %s78 = int_to_ptr.vmem [resolvable:$true] %s77
  %80 = dma.hbm_to_vmem [thread:$0]  %s67, 16, %s78, %s69
  %s81 = sadd.s32 %s15, 4
  %s82 = sld [smem:[#allocation5 + %s81]]
  %s83 = smul.addr %s82, 16
  %s84 = scalar_lea.hbm %s1, %s83
  %s85 = scalar_lea.vmem [#allocation2], 4
  %s86 = scalar_lea.sflag [#allocation3], 4
  // Predicated region
  $region18: #{model_with_prompt_forward.2} parent=0 // pred_check
    _
  $region19: #{model_with_prompt_forward.2} parent=0 // pred_check_branch
    %88 = sbr.rel target = $region21
  $region20: #{model_with_prompt_forward.2} parent=0 // pred_region
    %89 = sst [smem:[#allocation8]] [#allocation17]
    %90 = sst [smem:[#allocation9]] [#allocation16]
  $region21: #{model_with_prompt_forward.2} parent=0 // pred_fallthru
    _
  %92 = shalt.err (0)
  %s94 = sshll.u32 %s85, 4
  %s95 = int_to_ptr.vmem [resolvable:$true] %s94
  %97 = dma.hbm_to_vmem [thread:$0]  %s84, 16, %s95, %s86
  %s98 = sadd.s32 %s15, 5
  %s99 = sld [smem:[#allocation5 + %s98]]
  %s100 = smul.addr %s99, 16
  %s101 = scalar_lea.hbm %s1, %s100
  %s102 = scalar_lea.vmem [#allocation2], 5
  %s103 = scalar_lea.sflag [#allocation3], 5
  // Predicated region
  $region22: #{model_with_prompt_forward.2} parent=0 // pred_check
    _
  $region23: #{model_with_prompt_forward.2} parent=0 // pred_check_branch
    %105 = sbr.rel target = $region25
  $region24: #{model_with_prompt_forward.2} parent=0 // pred_region
    %106 = sst [smem:[#allocation8]] [#allocation19]
    %107 = sst [smem:[#allocation9]] [#allocation18]
  $region25: #{model_with_prompt_forward.2} parent=0 // pred_fallthru
    _
  %109 = shalt.err (0)
  %s111 = sshll.u32 %s102, 4
  %s112 = int_to_ptr.vmem [resolvable:$true] %s111
  %114 = dma.hbm_to_vmem [thread:$0]  %s101, 16, %s112, %s103
  %s115 = sadd.s32 %s15, 6
  %s116 = sld [smem:[#allocation5 + %s115]]
  %s117 = smul.addr %s116, 16
  %s118 = scalar_lea.hbm %s1, %s117
  %s119 = scalar_lea.vmem [#allocation2], 6
  %s120 = scalar_lea.sflag [#allocation3], 6
  // Predicated region
  $region26: #{model_with_prompt_forward.2} parent=0 // pred_check
    _
  $region27: #{model_with_prompt_forward.2} parent=0 // pred_check_branch
    %122 = sbr.rel target = $region29
  $region28: #{model_with_prompt_forward.2} parent=0 // pred_region
    %123 = sst [smem:[#allocation8]] [#allocation21]
    %124 = sst [smem:[#allocation9]] [#allocation20]
  $region29: #{model_with_prompt_forward.2} parent=0 // pred_fallthru
    _
  %126 = shalt.err (0)
  %s128 = sshll.u32 %s119, 4
  %s129 = int_to_ptr.vmem [resolvable:$true] %s128
  %131 = dma.hbm_to_vmem [thread:$0]  %s118, 16, %s129, %s120
  %s132 = sadd.s32 %s15, 7
  %s133 = sld [smem:[#allocation5 + %s132]]
  %s134 = smul.addr %s133, 16
  %s135 = scalar_lea.hbm %s1, %s134
  %s136 = scalar_lea.vmem [#allocation2], 7
  %s137 = scalar_lea.sflag [#allocation3], 7
  // Predicated region
  $region30: #{model_with_prompt_forward.2} parent=0 // pred_check
    _
  $region31: #{model_with_prompt_forward.2} parent=0 // pred_check_branch
    %139 = sbr.rel target = $region33
  $region32: #{model_with_prompt_forward.2} parent=0 // pred_region
    %140 = sst [smem:[#allocation8]] [#allocation23]
    %141 = sst [smem:[#allocation9]] [#allocation22]
  $region33: #{model_with_prompt_forward.2} parent=0 // pred_fallthru
    _
  %143 = shalt.err (0)
  %s145 = sshll.u32 %s136, 4
  %s146 = int_to_ptr.vmem [resolvable:$true] %s145
  %148 = dma.hbm_to_vmem [thread:$0]  %s135, 16, %s146, %s137
  %s149 = sadd.s32 %s15, 8
  %s150 = sld [smem:[#allocation5 + %s149]]
  %s151 = smul.addr %s150, 16
  %s152 = scalar_lea.hbm %s1, %s151
  %s153 = scalar_lea.vmem [#allocation2], 8
  %s154 = scalar_lea.sflag [#allocation3], 8
  // Predicated region
  $region34: #{model_with_prompt_forward.2} parent=0 // pred_check
    _
  $region35: #{model_with_prompt_forward.2} parent=0 // pred_check_branch
    %156 = sbr.rel target = $region37
  $region36: #{model_with_prompt_forward.2} parent=0 // pred_region
    %157 = sst [smem:[#allocation8]] [#allocation25]
    %158 = sst [smem:[#allocation9]] [#allocation24]
  $region37: #{model_with_prompt_forward.2} parent=0 // pred_fallthru
    _
  %160 = shalt.err (0)
  %s162 = sshll.u32 %s153, 4
  %s163 = int_to_ptr.vmem [resolvable:$true] %s162
  %165 = dma.hbm_to_vmem [thread:$0]  %s152, 16, %s163, %s154
  %s166 = sadd.s32 %s15, 9
  %s167 = sld [smem:[#allocation5 + %s166]]
  %s168 = smul.addr %s167, 16
  %s169 = scalar_lea.hbm %s1, %s168
  %s170 = scalar_lea.vmem [#allocation2], 9
  %s171 = scalar_lea.sflag [#allocation3], 9
  // Predicated region
  $region38: #{model_with_prompt_forward.2} parent=0 // pred_check
    _
  $region39: #{model_with_prompt_forward.2} parent=0 // pred_check_branch
    %173 = sbr.rel target = $region41
  $region40: #{model_with_prompt_forward.2} parent=0 // pred_region
    %174 = sst [smem:[#allocation8]] [#allocation27]
    %175 = sst [smem:[#allocation9]] [#allocation26]
  $region41: #{model_with_prompt_forward.2} parent=0 // pred_fallthru
    _
  %177 = shalt.err (0)
  %s179 = sshll.u32 %s170, 4
  %s180 = int_to_ptr.vmem [resolvable:$true] %s179
  %182 = dma.hbm_to_vmem [thread:$0]  %s169, 16, %s180, %s171
  %s183 = sadd.s32 %s15, 10
  %s184 = sld [smem:[#allocation5 + %s183]]
  %s185 = smul.addr %s184, 16
  %s186 = scalar_lea.hbm %s1, %s185
  %s187 = scalar_lea.vmem [#allocation2], 10
  %s188 = scalar_lea.sflag [#allocation3], 10
  // Predicated region
  $region42: #{model_with_prompt_forward.2} parent=0 // pred_check
    _
  $region43: #{model_with_prompt_forward.2} parent=0 // pred_check_branch
    %190 = sbr.rel target = $region45
  $region44: #{model_with_prompt_forward.2} parent=0 // pred_region
    %191 = sst [smem:[#allocation8]] [#allocation29]
    %192 = sst [smem:[#allocation9]] [#allocation28]
  $region45: #{model_with_prompt_forward.2} parent=0 // pred_fallthru
    _
  %194 = shalt.err (0)
  %s196 = sshll.u32 %s187, 4
  %s197 = int_to_ptr.vmem [resolvable:$true] %s196
  %199 = dma.hbm_to_vmem [thread:$0]  %s186, 16, %s197, %s188
  %s200 = sadd.s32 %s15, 11
  %s201 = sld [smem:[#allocation5 + %s200]]
  %s202 = smul.addr %s201, 16
  %s203 = scalar_lea.hbm %s1, %s202
  %s204 = scalar_lea.vmem [#allocation2], 11
  %s205 = scalar_lea.sflag [#allocation3], 11
  // Predicated region
  $region46: #{model_with_prompt_forward.2} parent=0 // pred_check
    _
  $region47: #{model_with_prompt_forward.2} parent=0 // pred_check_branch
    %207 = sbr.rel target = $region49
  $region48: #{model_with_prompt_forward.2} parent=0 // pred_region
    %208 = sst [smem:[#allocation8]] [#allocation31]
    %209 = sst [smem:[#allocation9]] [#allocation30]
  $region49: #{model_with_prompt_forward.2} parent=0 // pred_fallthru
    _
  %211 = shalt.err (0)
  %s213 = sshll.u32 %s204, 4
  %s214 = int_to_ptr.vmem [resolvable:$true] %s213
  %216 = dma.hbm_to_vmem [thread:$0]  %s203, 16, %s214, %s205
  %s217 = sadd.s32 %s15, 12
  %s218 = sld [smem:[#allocation5 + %s217]]
  %s219 = smul.addr %s218, 16
  %s220 = scalar_lea.hbm %s1, %s219
  %s221 = scalar_lea.vmem [#allocation2], 12
  %s222 = scalar_lea.sflag [#allocation3], 12
  // Predicated region
  $region50: #{model_with_prompt_forward.2} parent=0 // pred_check
    _
  $region51: #{model_with_prompt_forward.2} parent=0 // pred_check_branch
    %224 = sbr.rel target = $region53
  $region52: #{model_with_prompt_forward.2} parent=0 // pred_region
    %225 = sst [smem:[#allocation8]] [#allocation33]
    %226 = sst [smem:[#allocation9]] [#allocation32]
  $region53: #{model_with_prompt_forward.2} parent=0 // pred_fallthru
    _
  %228 = shalt.err (0)
  %s230 = sshll.u32 %s221, 4
  %s231 = int_to_ptr.vmem [resolvable:$true] %s230
  %233 = dma.hbm_to_vmem [thread:$0]  %s220, 16, %s231, %s222
  %s234 = sadd.s32 %s15, 13
  %s235 = sld [smem:[#allocation5 + %s234]]
  %s236 = smul.addr %s235, 16
  %s237 = scalar_lea.hbm %s1, %s236
  %s238 = scalar_lea.vmem [#allocation2], 13
  %s239 = scalar_lea.sflag [#allocation3], 13
  // Predicated region
  $region54: #{model_with_prompt_forward.2} parent=0 // pred_check
    _
  $region55: #{model_with_prompt_forward.2} parent=0 // pred_check_branch
    %241 = sbr.rel target = $region57
  $region56: #{model_with_prompt_forward.2} parent=0 // pred_region
    %242 = sst [smem:[#allocation8]] [#allocation35]
    %243 = sst [smem:[#allocation9]] [#allocation34]
  $region57: #{model_with_prompt_forward.2} parent=0 // pred_fallthru
    _
  %245 = shalt.err (0)
  %s247 = sshll.u32 %s238, 4
  %s248 = int_to_ptr.vmem [resolvable:$true] %s247
  %250 = dma.hbm_to_vmem [thread:$0]  %s237, 16, %s248, %s239
  %s251 = sadd.s32 %s15, 14
  %s252 = sld [smem:[#allocation5 + %s251]]
  %s253 = smul.addr %s252, 16
  %s254 = scalar_lea.hbm %s1, %s253
  %s255 = scalar_lea.vmem [#allocation2], 14
  %s256 = scalar_lea.sflag [#allocation3], 14
  // Predicated region
  $region58: #{model_with_prompt_forward.2} parent=0 // pred_check
    _
  $region59: #{model_with_prompt_forward.2} parent=0 // pred_check_branch
    %258 = sbr.rel target = $region61
  $region60: #{model_with_prompt_forward.2} parent=0 // pred_region
    %259 = sst [smem:[#allocation8]] [#allocation37]
    %260 = sst [smem:[#allocation9]] [#allocation36]
  $region61: #{model_with_prompt_forward.2} parent=0 // pred_fallthru
    _
  %262 = shalt.err (0)
  %s264 = sshll.u32 %s255, 4
  %s265 = int_to_ptr.vmem [resolvable:$true] %s264
  %267 = dma.hbm_to_vmem [thread:$0]  %s254, 16, %s265, %s256
  %s268 = sadd.s32 %s15, 15
  %s269 = sld [smem:[#allocation5 + %s268]]
  %s270 = smul.addr %s269, 16
  %s271 = scalar_lea.hbm %s1, %s270
  %s272 = scalar_lea.vmem [#allocation2], 15
  %s273 = scalar_lea.sflag [#allocation3], 15
  // Predicated region
  $region62: #{model_with_prompt_forward.2} parent=0 // pred_check
    _
  $region63: #{model_with_prompt_forward.2} parent=0 // pred_check_branch
    %275 = sbr.rel target = $region65
  $region64: #{model_with_prompt_forward.2} parent=0 // pred_region
    %276 = sst [smem:[#allocation8]] [#allocation39]
    %277 = sst [smem:[#allocation9]] [#allocation38]
  $region65: #{model_with_prompt_forward.2} parent=0 // pred_fallthru
    _
  %279 = shalt.err (0)
  %s281 = sshll.u32 %s272, 4
  %s282 = int_to_ptr.vmem [resolvable:$true] %s281
  %284 = dma.hbm_to_vmem [thread:$0]  %s271, 16, %s282, %s273
  %286 = dma.done [#allocation3], 16
  %288 = dma.done %s35, 16
  %290 = dma.done %s52, 16
  %292 = dma.done %s69, 16
  %294 = dma.done %s86, 16
  %296 = dma.done %s103, 16
  %298 = dma.done %s120, 16
  %300 = dma.done %s137, 16
  %302 = dma.done %s154, 16
  %304 = dma.done %s171, 16
  %306 = dma.done %s188, 16
  %308 = dma.done %s205, 16
  %310 = dma.done %s222, 16
  %312 = dma.done %s239, 16
  %314 = dma.done %s256, 16
  %316 = dma.done %s273, 16
  %v317 = vld [vmem:[#allocation2] sm:$0xff]
  %v318 = vld [vmem:[#allocation2 + $0x8] sm:$0xff]
  %319 = vst [vmem:[%s2] sm:$0xff] %v317
  %320 = vst [vmem:[%s2 + $0x8] sm:$0xff] %v318
  %v321 = vpack.c.bf16 %v318, %v317
  %v323 = vunpack.c.l.b16 %v321
  %v324 = vunpack.c.h.b16 %v321
  %v325 = vpack.c.b16 %v323, %v323
  %v326 = vpack.c.b16 %v324, %v324
  %329 = vst [vmem:[%s3] sm:$0xf] %v325
  %330 = vst [vmem:[%s3 + $0x4] sm:$0xf] %v326
  // Predicated region
  $region66: #{model_with_prompt_forward.2} parent=0 // pred_check
    _
  $region67: #{model_with_prompt_forward.2} parent=0 // pred_check_branch
    %332 = sbr.rel (0) target = $region69
  $region68: #{model_with_prompt_forward.2} parent=0 // pred_region
    _
  $region69: #{model_with_prompt_forward.2} parent=0 // pred_fallthru
    _
  // Predicated region
  $region70: #{model_with_prompt_forward.2} parent=0 // pred_check
    _
  $region71: #{model_with_prompt_forward.2} parent=0 // pred_check_branch
    %334 = sbr.rel (0) target = $region73
  $region72: #{model_with_prompt_forward.2} parent=0 // pred_region
    _
  $region73: #{model_with_prompt_forward.2} parent=0 // pred_fallthru
    _
  // Predicated region
  $region74: #{model_with_prompt_forward.2} parent=0 // pred_check
    _
  $region75: #{model_with_prompt_forward.2} parent=0 // pred_check_branch
    %336 = sbr.rel (0) target = $region77
  $region76: #{model_with_prompt_forward.2} parent=0 // pred_region
    _
  $region77: #{model_with_prompt_forward.2} parent=0 // pred_fallthru
    _
  // Predicated region
  $region78: #{model_with_prompt_forward.2} parent=0 // pred_check
    _
  $region79: #{model_with_prompt_forward.2} parent=0 // pred_check_branch
    %338 = sbr.rel (0) target = $region81
  $region80: #{model_with_prompt_forward.2} parent=0 // pred_region
    _
  $region81: #{model_with_prompt_forward.2} parent=0 // pred_fallthru
    _
  %339 = vsyncmov [#allocation3]
  %s340 = vpop.sfrf %339
  %p341 = scmp.eq.s32.totalorder %s340, 0
  %p342 = pneg %p341
  %344 = shalt.err (%p342)
  %s345 = scalar_lea.sflag [#allocation3], 1
  %346 = vsyncmov %s345
  %s347 = vpop.sfrf %346
  %p348 = scmp.eq.s32.totalorder %s347, 0
  %p349 = pneg %p348
  %351 = shalt.err (%p349)
  %s352 = scalar_lea.sflag [#allocation3], 2
  %353 = vsyncmov %s352
  %s354 = vpop.sfrf %353
  %p355 = scmp.eq.s32.totalorder %s354, 0
  %p356 = pneg %p355
  %358 = shalt.err (%p356)
  %s359 = scalar_lea.sflag [#allocation3], 3
  %360 = vsyncmov %s359
  %s361 = vpop.sfrf %360
  %p362 = scmp.eq.s32.totalorder %s361, 0
  %p363 = pneg %p362
  %365 = shalt.err (%p363)
  %s366 = scalar_lea.sflag [#allocation3], 4
  %367 = vsyncmov %s366
  %s368 = vpop.sfrf %367
  %p369 = scmp.eq.s32.totalorder %s368, 0
  %p370 = pneg %p369
  %372 = shalt.err (%p370)
  %s373 = scalar_lea.sflag [#allocation3], 5
  %374 = vsyncmov %s373
  %s375 = vpop.sfrf %374
  %p376 = scmp.eq.s32.totalorder %s375, 0
  %p377 = pneg %p376
  %379 = shalt.err (%p377)
  %s380 = scalar_lea.sflag [#allocation3], 6
  %381 = vsyncmov %s380
  %s382 = vpop.sfrf %381
  %p383 = scmp.eq.s32.totalorder %s382, 0
  %p384 = pneg %p383
  %386 = shalt.err (%p384)
  %s387 = scalar_lea.sflag [#allocation3], 7
  %388 = vsyncmov %s387
  %s389 = vpop.sfrf %388
  %p390 = scmp.eq.s32.totalorder %s389, 0
  %p391 = pneg %p390
  %393 = shalt.err (%p391)
  %s394 = scalar_lea.sflag [#allocation3], 8
  %395 = vsyncmov %s394
  %s396 = vpop.sfrf %395
  %p397 = scmp.eq.s32.totalorder %s396, 0
  %p398 = pneg %p397
  %400 = shalt.err (%p398)
  %s401 = scalar_lea.sflag [#allocation3], 9
  %402 = vsyncmov %s401
  %s403 = vpop.sfrf %402
  %p404 = scmp.eq.s32.totalorder %s403, 0
  %p405 = pneg %p404
  %407 = shalt.err (%p405)
  %s408 = scalar_lea.sflag [#allocation3], 10
  %409 = vsyncmov %s408
  %s410 = vpop.sfrf %409
  %p411 = scmp.eq.s32.totalorder %s410, 0
  %p412 = pneg %p411
  %414 = shalt.err (%p412)
  %s415 = scalar_lea.sflag [#allocation3], 11
  %416 = vsyncmov %s415
  %s417 = vpop.sfrf %416
  %p418 = scmp.eq.s32.totalorder %s417, 0
  %p419 = pneg %p418
  %421 = shalt.err (%p419)
  %s422 = scalar_lea.sflag [#allocation3], 12
  %423 = vsyncmov %s422
  %s424 = vpop.sfrf %423
  %p425 = scmp.eq.s32.totalorder %s424, 0
  %p426 = pneg %p425
  %428 = shalt.err (%p426)
  %s429 = scalar_lea.sflag [#allocation3], 13
  %430 = vsyncmov %s429
  %s431 = vpop.sfrf %430
  %p432 = scmp.eq.s32.totalorder %s431, 0
  %p433 = pneg %p432
  %435 = shalt.err (%p433)
  %s436 = scalar_lea.sflag [#allocation3], 14
  %437 = vsyncmov %s436
  %s438 = vpop.sfrf %437
  %p439 = scmp.eq.s32.totalorder %s438, 0
  %p440 = pneg %p439
  %442 = shalt.err (%p440)
  %s443 = scalar_lea.sflag [#allocation3], 15
  %444 = vsyncmov %s443
  %s445 = vpop.sfrf %444
  %p446 = scmp.eq.s32.totalorder %s445, 0
  %p447 = pneg %p446
  %449 = shalt.err (%p447)

// kernel: model_with_prompt_forward.3
$region0: #{model_with_prompt_forward.3}
  #allocation0 [shape = 'u32[]', space=smem, size = 0x4, offset = 0x4, fixed_abs, tag = 'smem constant byte address 0x4 - core index']
  #allocation1 [shape = 'u32[144,128]{1,0:T(1,128)}', space=vmem, size = 0x12000, scoped, tag = 'internal scratch']
  %s0 = inlined_call_operand.vmem [shape: bf16[256,128], index: 0, kind: input, shape index: {}]
  %s1 = inlined_call_operand.vmem [shape: bf16[128,256], index: 1, kind: input, shape index: {}]
  %s2 = inlined_call_operand.vmem [shape: f32[256,256], index: 2, kind: output, shape index: {}]
  %s3 = sld [smem:[#allocation0]]
  $region22: #{model_with_prompt_forward.3} parent=0
    _
  %s5 = ssub.s32 1, %s3
  %s6 = scalar_select 0, %s5, %s3
  // Predicated region
  $region2: #{model_with_prompt_forward.3} parent=0 // pred_check
    _
  $region3: #{model_with_prompt_forward.3} parent=0 // pred_check_branch
    %8 = sbr.rel (0) target = $region5
  $region4: #{model_with_prompt_forward.3} parent=0 // pred_region
    _
  $region5: #{model_with_prompt_forward.3} parent=0 // pred_fallthru
    _
  // Predicated region
  $region6: #{model_with_prompt_forward.3} parent=0 // pred_check
    _
  $region7: #{model_with_prompt_forward.3} parent=0 // pred_check_branch
    %10 = sbr.rel (0) target = $region9
  $region8: #{model_with_prompt_forward.3} parent=0 // pred_region
    _
  $region9: #{model_with_prompt_forward.3} parent=0 // pred_fallthru
    _
  %p12 = scmp.eq.s32.totalorder 0, 0
  // Predicated region
  $region10: #{model_with_prompt_forward.3} parent=0 // pred_check
    %p13 = pneg %p12
  $region11: #{model_with_prompt_forward.3} parent=0 // pred_check_branch
    %15 = sbr.rel (%p13) target = $region13
  $region12: #{model_with_prompt_forward.3} parent=0 // pred_region
    %16 = vst [vmem:[%s2] sm:$0xff] 0.0
    %17 = vst [vmem:[%s2 + $0x8] sm:$0xff] 0.0
    %18 = vst [vmem:[%s2 + $0x10] sm:$0xff] 0.0
    %19 = vst [vmem:[%s2 + $0x18] sm:$0xff] 0.0
    %20 = vst [vmem:[%s2 + $0x20] sm:$0xff] 0.0
    %21 = vst [vmem:[%s2 + $0x28] sm:$0xff] 0.0
    %22 = vst [vmem:[%s2 + $0x30] sm:$0xff] 0.0
    %23 = vst [vmem:[%s2 + $0x38] sm:$0xff] 0.0
    %24 = vst [vmem:[%s2 + $0x40] sm:$0xff] 0.0
    %25 = vst [vmem:[%s2 + $0x48] sm:$0xff] 0.0
    %26 = vst [vmem:[%s2 + $0x50] sm:$0xff] 0.0
    %27 = vst [vmem:[%s2 + $0x58] sm:$0xff] 0.0
    %28 = vst [vmem:[%s2 + $0x60] sm:$0xff] 0.0
    %29 = vst [vmem:[%s2 + $0x68] sm:$0xff] 0.0
    %30 = vst [vmem:[%s2 + $0x70] sm:$0xff] 0.0
    %31 = vst [vmem:[%s2 + $0x78] sm:$0xff] 0.0
    %32 = vst [vmem:[%s2 + $0x80] sm:$0xff] 0.0
    %33 = vst [vmem:[%s2 + $0x88] sm:$0xff] 0.0
    %34 = vst [vmem:[%s2 + $0x90] sm:$0xff] 0.0
    %35 = vst [vmem:[%s2 + $0x98] sm:$0xff] 0.0
    %36 = vst [vmem:[%s2 + $0xa0] sm:$0xff] 0.0
    %37 = vst [vmem:[%s2 + $0xa8] sm:$0xff] 0.0
    %38 = vst [vmem:[%s2 + $0xb0] sm:$0xff] 0.0
    %39 = vst [vmem:[%s2 + $0xb8] sm:$0xff] 0.0
    %40 = vst [vmem:[%s2 + $0xc0] sm:$0xff] 0.0
    %41 = vst [vmem:[%s2 + $0xc8] sm:$0xff] 0.0
    %42 = vst [vmem:[%s2 + $0xd0] sm:$0xff] 0.0
    %43 = vst [vmem:[%s2 + $0xd8] sm:$0xff] 0.0
    %44 = vst [vmem:[%s2 + $0xe0] sm:$0xff] 0.0
    %45 = vst [vmem:[%s2 + $0xe8] sm:$0xff] 0.0
    %46 = vst [vmem:[%s2 + $0xf0] sm:$0xff] 0.0
    %47 = vst [vmem:[%s2 + $0xf8] sm:$0xff] 0.0
    %48 = vst [vmem:[%s2 + $0x100] sm:$0xff] 0.0
    %49 = vst [vmem:[%s2 + $0x108] sm:$0xff] 0.0
    %50 = vst [vmem:[%s2 + $0x110] sm:$0xff] 0.0
    %51 = vst [vmem:[%s2 + $0x118] sm:$0xff] 0.0
    %52 = vst [vmem:[%s2 + $0x120] sm:$0xff] 0.0
    %53 = vst [vmem:[%s2 + $0x128] sm:$0xff] 0.0
    %54 = vst [vmem:[%s2 + $0x130] sm:$0xff] 0.0
    %55 = vst [vmem:[%s2 + $0x138] sm:$0xff] 0.0
    %56 = vst [vmem:[%s2 + $0x140] sm:$0xff] 0.0
    %57 = vst [vmem:[%s2 + $0x148] sm:$0xff] 0.0
    %58 = vst [vmem:[%s2 + $0x150] sm:$0xff] 0.0
    %59 = vst [vmem:[%s2 + $0x158] sm:$0xff] 0.0
    %60 = vst [vmem:[%s2 + $0x160] sm:$0xff] 0.0
    %61 = vst [vmem:[%s2 + $0x168] sm:$0xff] 0.0
    %62 = vst [vmem:[%s2 + $0x170] sm:$0xff] 0.0
    %63 = vst [vmem:[%s2 + $0x178] sm:$0xff] 0.0
    %64 = vst [vmem:[%s2 + $0x180] sm:$0xff] 0.0
    %65 = vst [vmem:[%s2 + $0x188] sm:$0xff] 0.0
    %66 = vst [vmem:[%s2 + $0x190] sm:$0xff] 0.0
    %67 = vst [vmem:[%s2 + $0x198] sm:$0xff] 0.0
    %68 = vst [vmem:[%s2 + $0x1a0] sm:$0xff] 0.0
    %69 = vst [vmem:[%s2 + $0x1a8] sm:$0xff] 0.0
    %70 = vst [vmem:[%s2 + $0x1b0] sm:$0xff] 0.0
    %71 = vst [vmem:[%s2 + $0x1b8] sm:$0xff] 0.0
    %72 = vst [vmem:[%s2 + $0x1c0] sm:$0xff] 0.0
    %73 = vst [vmem:[%s2 + $0x1c8] sm:$0xff] 0.0
    %74 = vst [vmem:[%s2 + $0x1d0] sm:$0xff] 0.0
    %75 = vst [vmem:[%s2 + $0x1d8] sm:$0xff] 0.0
    %76 = vst [vmem:[%s2 + $0x1e0] sm:$0xff] 0.0
    %77 = vst [vmem:[%s2 + $0x1e8] sm:$0xff] 0.0
    %78 = vst [vmem:[%s2 + $0x1f0] sm:$0xff] 0.0
    %79 = vst [vmem:[%s2 + $0x1f8] sm:$0xff] 0.0
  $region13: #{model_with_prompt_forward.3} parent=0 // pred_fallthru
    _
  %s80 = smul.u32 0, 128
  %v81 = vld [vmem:[%s2] sm:$0xff]
  %v82 = vld [vmem:[%s2 + $0x8] sm:$0xff]
  %v83 = vld [vmem:[%s2 + $0x10] sm:$0xff]
  %v84 = vld [vmem:[%s2 + $0x18] sm:$0xff]
  %v85 = vld [vmem:[%s2 + $0x20] sm:$0xff]
  %v86 = vld [vmem:[%s2 + $0x28] sm:$0xff]
  %v87 = vld [vmem:[%s2 + $0x30] sm:$0xff]
  %v88 = vld [vmem:[%s2 + $0x38] sm:$0xff]
  %v89 = vld [vmem:[%s2 + $0x40] sm:$0xff]
  %v90 = vld [vmem:[%s2 + $0x48] sm:$0xff]
  %v91 = vld [vmem:[%s2 + $0x50] sm:$0xff]
  %v92 = vld [vmem:[%s2 + $0x58] sm:$0xff]
  %v93 = vld [vmem:[%s2 + $0x60] sm:$0xff]
  %v94 = vld [vmem:[%s2 + $0x68] sm:$0xff]
  %v95 = vld [vmem:[%s2 + $0x70] sm:$0xff]
  %v96 = vld [vmem:[%s2 + $0x78] sm:$0xff]
  %v97 = vld [vmem:[%s2 + $0x80] sm:$0xff]
  %v98 = vld [vmem:[%s2 + $0x88] sm:$0xff]
  %v99 = vld [vmem:[%s2 + $0x90] sm:$0xff]
  %v100 = vld [vmem:[%s2 + $0x98] sm:$0xff]
  %v101 = vld [vmem:[%s2 + $0xa0] sm:$0xff]
  %v102 = vld [vmem:[%s2 + $0xa8] sm:$0xff]
  %v103 = vld [vmem:[%s2 + $0xb0] sm:$0xff]
  %v104 = vld [vmem:[%s2 + $0xb8] sm:$0xff]
  %v105 = vld [vmem:[%s2 + $0xc0] sm:$0xff]
  %v106 = vld [vmem:[%s2 + $0xc8] sm:$0xff]
  %v107 = vld [vmem:[%s2 + $0xd0] sm:$0xff]
  %v108 = vld [vmem:[%s2 + $0xd8] sm:$0xff]
  %v109 = vld [vmem:[%s2 + $0xe0] sm:$0xff]
  %v110 = vld [vmem:[%s2 + $0xe8] sm:$0xff]
  %v111 = vld [vmem:[%s2 + $0xf0] sm:$0xff]
  %v112 = vld [vmem:[%s2 + $0xf8] sm:$0xff]
  %v113 = vld [vmem:[%s2 + $0x100] sm:$0xff]
  %v114 = vld [vmem:[%s2 + $0x108] sm:$0xff]
  %v115 = vld [vmem:[%s2 + $0x110] sm:$0xff]
  %v116 = vld [vmem:[%s2 + $0x118] sm:$0xff]
  %v117 = vld [vmem:[%s2 + $0x120] sm:$0xff]
  %v118 = vld [vmem:[%s2 + $0x128] sm:$0xff]
  %v119 = vld [vmem:[%s2 + $0x130] sm:$0xff]
  %v120 = vld [vmem:[%s2 + $0x138] sm:$0xff]
  %v121 = vld [vmem:[%s2 + $0x140] sm:$0xff]
  %v122 = vld [vmem:[%s2 + $0x148] sm:$0xff]
  %v123 = vld [vmem:[%s2 + $0x150] sm:$0xff]
  %v124 = vld [vmem:[%s2 + $0x158] sm:$0xff]
  %v125 = vld [vmem:[%s2 + $0x160] sm:$0xff]
  %v126 = vld [vmem:[%s2 + $0x168] sm:$0xff]
  %v127 = vld [vmem:[%s2 + $0x170] sm:$0xff]
  %v128 = vld [vmem:[%s2 + $0x178] sm:$0xff]
  %v129 = vld [vmem:[%s2 + $0x180] sm:$0xff]
  %v130 = vld [vmem:[%s2 + $0x188] sm:$0xff]
  %v131 = vld [vmem:[%s2 + $0x190] sm:$0xff]
  %v132 = vld [vmem:[%s2 + $0x198] sm:$0xff]
  %v133 = vld [vmem:[%s2 + $0x1a0] sm:$0xff]
  %v134 = vld [vmem:[%s2 + $0x1a8] sm:$0xff]
  %v135 = vld [vmem:[%s2 + $0x1b0] sm:$0xff]
  %v136 = vld [vmem:[%s2 + $0x1b8] sm:$0xff]
  %v137 = vld [vmem:[%s2 + $0x1c0] sm:$0xff]
  %v138 = vld [vmem:[%s2 + $0x1c8] sm:$0xff]
  %v139 = vld [vmem:[%s2 + $0x1d0] sm:$0xff]
  %v140 = vld [vmem:[%s2 + $0x1d8] sm:$0xff]
  %v141 = vld [vmem:[%s2 + $0x1e0] sm:$0xff]
  %v142 = vld [vmem:[%s2 + $0x1e8] sm:$0xff]
  %v143 = vld [vmem:[%s2 + $0x1f0] sm:$0xff]
  %v144 = vld [vmem:[%s2 + $0x1f8] sm:$0xff]
  %s145 = sshra.s32 %s80, 7
  %s146 = sand.u32 %s80, 127
  %s147 = smul.addr %s145, 4
  %s148 = scalar_lea.vmem %s0, %s147
  %v149 = vld [vmem:[%s148] sm:$0xf]
  %v150 = vld [vmem:[%s148 + $0x4] sm:$0xf]
  %v151 = vld [vmem:[%s148 + $0x8] sm:$0xf]
  %v152 = vld [vmem:[%s148 + $0xc] sm:$0xf]
  %v153 = vld [vmem:[%s148 + $0x10] sm:$0xf]
  %v154 = vld [vmem:[%s148 + $0x14] sm:$0xf]
  %v155 = vld [vmem:[%s148 + $0x18] sm:$0xf]
  %v156 = vld [vmem:[%s148 + $0x1c] sm:$0xf]
  %v157 = vld [vmem:[%s148 + $0x20] sm:$0xf]
  %v158 = vld [vmem:[%s148 + $0x24] sm:$0xf]
  %v159 = vld [vmem:[%s148 + $0x28] sm:$0xf]
  %v160 = vld [vmem:[%s148 + $0x2c] sm:$0xf]
  %v161 = vld [vmem:[%s148 + $0x30] sm:$0xf]
  %v162 = vld [vmem:[%s148 + $0x34] sm:$0xf]
  %v163 = vld [vmem:[%s148 + $0x38] sm:$0xf]
  %v164 = vld [vmem:[%s148 + $0x3c] sm:$0xf]
  %v165 = vld [vmem:[%s148 + $0x40] sm:$0xf]
  %v166 = vld [vmem:[%s148 + $0x44] sm:$0xf]
  %v167 = vld [vmem:[%s148 + $0x48] sm:$0xf]
  %v168 = vld [vmem:[%s148 + $0x4c] sm:$0xf]
  %v169 = vld [vmem:[%s148 + $0x50] sm:$0xf]
  %v170 = vld [vmem:[%s148 + $0x54] sm:$0xf]
  %v171 = vld [vmem:[%s148 + $0x58] sm:$0xf]
  %v172 = vld [vmem:[%s148 + $0x5c] sm:$0xf]
  %v173 = vld [vmem:[%s148 + $0x60] sm:$0xf]
  %v174 = vld [vmem:[%s148 + $0x64] sm:$0xf]
  %v175 = vld [vmem:[%s148 + $0x68] sm:$0xf]
  %v176 = vld [vmem:[%s148 + $0x6c] sm:$0xf]
  %v177 = vld [vmem:[%s148 + $0x70] sm:$0xf]
  %v178 = vld [vmem:[%s148 + $0x74] sm:$0xf]
  %v179 = vld [vmem:[%s148 + $0x78] sm:$0xf]
  %v180 = vld [vmem:[%s148 + $0x7c] sm:$0xf]
  %v181 = vld [vmem:[%s1] sm:$0xff]
  %v182 = vld [vmem:[%s1 + $0x8] sm:$0xff]
  %v183 = vld [vmem:[%s1 + $0x10] sm:$0xff]
  %v184 = vld [vmem:[%s1 + $0x18] sm:$0xff]
  %v185 = vld [vmem:[%s1 + $0x20] sm:$0xff]
  %v186 = vld [vmem:[%s1 + $0x28] sm:$0xff]
  %v187 = vld [vmem:[%s1 + $0x30] sm:$0xff]
  %v188 = vld [vmem:[%s1 + $0x38] sm:$0xff]
  %v189 = vld [vmem:[%s1 + $0x40] sm:$0xff]
  %v190 = vld [vmem:[%s1 + $0x48] sm:$0xff]
  %v191 = vld [vmem:[%s1 + $0x50] sm:$0xff]
  %v192 = vld [vmem:[%s1 + $0x58] sm:$0xff]
  %v193 = vld [vmem:[%s1 + $0x60] sm:$0xff]
  %v194 = vld [vmem:[%s1 + $0x68] sm:$0xff]
  %v195 = vld [vmem:[%s1 + $0x70] sm:$0xff]
  %v196 = vld [vmem:[%s1 + $0x78] sm:$0xff]
  %v229 = vunpack.c.l.b16 %v149
  %v230 = vunpack.c.l.b16 %v150
  %v231 = vunpack.c.l.b16 %v151
  %v232 = vunpack.c.l.b16 %v152
  %v233 = vunpack.c.l.b16 %v153
  %v234 = vunpack.c.l.b16 %v154
  %v235 = vunpack.c.l.b16 %v155
  %v236 = vunpack.c.l.b16 %v156
  %v237 = vunpack.c.l.b16 %v157
  %v238 = vunpack.c.l.b16 %v158
  %v239 = vunpack.c.l.b16 %v159
  %v240 = vunpack.c.l.b16 %v160
  %v241 = vunpack.c.l.b16 %v161
  %v242 = vunpack.c.l.b16 %v162
  %v243 = vunpack.c.l.b16 %v163
  %v244 = vunpack.c.l.b16 %v164
  %v245 = vunpack.c.l.b16 %v165
  %v246 = vunpack.c.l.b16 %v166
  %v247 = vunpack.c.l.b16 %v167
  %v248 = vunpack.c.l.b16 %v168
  %v249 = vunpack.c.l.b16 %v169
  %v250 = vunpack.c.l.b16 %v170
  %v251 = vunpack.c.l.b16 %v171
  %v252 = vunpack.c.l.b16 %v172
  %v253 = vunpack.c.l.b16 %v173
  %v254 = vunpack.c.l.b16 %v174
  %v255 = vunpack.c.l.b16 %v175
  %v256 = vunpack.c.l.b16 %v176
  %v257 = vunpack.c.l.b16 %v177
  %v258 = vunpack.c.l.b16 %v178
  %v259 = vunpack.c.l.b16 %v179
  %v260 = vunpack.c.l.b16 %v180
  %v261 = vpack.c.b16 %v230, %v229
  %v262 = vpack.c.b16 %v232, %v231
  %v263 = vpack.c.b16 %v234, %v233
  %v264 = vpack.c.b16 %v236, %v235
  %v265 = vpack.c.b16 %v238, %v237
  %v266 = vpack.c.b16 %v240, %v239
  %v267 = vpack.c.b16 %v242, %v241
  %v268 = vpack.c.b16 %v244, %v243
  %v269 = vpack.c.b16 %v246, %v245
  %v270 = vpack.c.b16 %v248, %v247
  %v271 = vpack.c.b16 %v250, %v249
  %v272 = vpack.c.b16 %v252, %v251
  %v273 = vpack.c.b16 %v254, %v253
  %v274 = vpack.c.b16 %v256, %v255
  %v275 = vpack.c.b16 %v258, %v257
  %v276 = vpack.c.b16 %v260, %v259
  %v309 = vunpack.c.l.b16 %v181
  %v310 = vunpack.c.h.b16 %v181
  %v311 = vunpack.c.l.b16 %v182
  %v312 = vunpack.c.h.b16 %v182
  %v313 = vunpack.c.l.b16 %v183
  %v314 = vunpack.c.h.b16 %v183
  %v315 = vunpack.c.l.b16 %v184
  %v316 = vunpack.c.h.b16 %v184
  %v317 = vunpack.c.l.b16 %v185
  %v318 = vunpack.c.h.b16 %v185
  %v319 = vunpack.c.l.b16 %v186
  %v320 = vunpack.c.h.b16 %v186
  %v321 = vunpack.c.l.b16 %v187
  %v322 = vunpack.c.h.b16 %v187
  %v323 = vunpack.c.l.b16 %v188
  %v324 = vunpack.c.h.b16 %v188
  %v325 = vunpack.c.l.b16 %v189
  %v326 = vunpack.c.h.b16 %v189
  %v327 = vunpack.c.l.b16 %v190
  %v328 = vunpack.c.h.b16 %v190
  %v329 = vunpack.c.l.b16 %v191
  %v330 = vunpack.c.h.b16 %v191
  %v331 = vunpack.c.l.b16 %v192
  %v332 = vunpack.c.h.b16 %v192
  %v333 = vunpack.c.l.b16 %v193
  %v334 = vunpack.c.h.b16 %v193
  %v335 = vunpack.c.l.b16 %v194
  %v336 = vunpack.c.h.b16 %v194
  %v337 = vunpack.c.l.b16 %v195
  %v338 = vunpack.c.h.b16 %v195
  %v339 = vunpack.c.l.b16 %v196
  %v340 = vunpack.c.h.b16 %v196
  %v341 = vpack.c.b16 %v311, %v309
  %v342 = vpack.c.b16 %v312, %v310
  %v343 = vpack.c.b16 %v315, %v313
  %v344 = vpack.c.b16 %v316, %v314
  %v345 = vpack.c.b16 %v319, %v317
  %v346 = vpack.c.b16 %v320, %v318
  %v347 = vpack.c.b16 %v323, %v321
  %v348 = vpack.c.b16 %v324, %v322
  %v349 = vpack.c.b16 %v327, %v325
  %v350 = vpack.c.b16 %v328, %v326
  %v351 = vpack.c.b16 %v331, %v329
  %v352 = vpack.c.b16 %v332, %v330
  %v353 = vpack.c.b16 %v335, %v333
  %v354 = vpack.c.b16 %v336, %v334
  %v355 = vpack.c.b16 %v339, %v337
  %v356 = vpack.c.b16 %v340, %v338
  %373 = vmatprep.subr.bf16.mxu0 %v342
  %374 = vmatpush1.bf16.msra.mxu0 %v341
  %375 = vmatprep.subr.bf16.mxu0 %v344
  %376 = vmatpush1.bf16.msra.mxu0 %v343
  %377 = vmatprep.subr.bf16.mxu0 %v346
  %378 = vmatpush1.bf16.msra.mxu0 %v345
  %379 = vmatprep.subr.bf16.mxu0 %v348
  %380 = vmatpush1.bf16.msra.mxu0 %v347
  %381 = vmatprep.subr.bf16.mxu0 %v350
  %382 = vmatpush1.bf16.msra.mxu0 %v349
  %383 = vmatprep.subr.bf16.mxu0 %v352
  %384 = vmatpush1.bf16.msra.mxu0 %v351
  %385 = vmatprep.subr.bf16.mxu0 %v354
  %386 = vmatpush1.bf16.msra.mxu0 %v353
  %387 = vmatprep.subr.bf16.mxu0 %v356
  %388 = vmatpush1.bf16.msra.mxu0 %v355
  %389 = vmatprep.subr.bf16.mxu0 0
  %390 = vmatpush1.bf16.msra.mxu0 0
  %391 = vmatprep.subr.bf16.mxu0 0
  %392 = vmatpush1.bf16.msra.mxu0 0
  %393 = vmatprep.subr.bf16.mxu0 0
  %394 = vmatpush1.bf16.msra.mxu0 0
  %395 = vmatprep.subr.bf16.mxu0 0
  %396 = vmatpush1.bf16.msra.mxu0 0
  %397 = vmatprep.subr.bf16.mxu0 0
  %398 = vmatpush1.bf16.msra.mxu0 0
  %399 = vmatprep.subr.bf16.mxu0 0
  %400 = vmatpush1.bf16.msra.mxu0 0
  %401 = vmatprep.subr.bf16.mxu0 0
  %402 = vmatpush1.bf16.msra.mxu0 0
  %403 = vmatprep.subr.bf16.mxu0 0
  %404 = vmatpush1.bf16.msra.mxu0 0
  %405 = vmatprep.mubr.bf16.mxu0 0
  %406 = vmatmul.mubr.bf16.gmra.mrb[0].mxu0 %v261
  %v407 = vpop.f32.mrb[0].mxu0
  %v408 = vadd.f32 0.0, %v407
  %v409 = vpop.f32.mrb[0].mxu0
  %v410 = vadd.f32 0.0, %v409
  %v411 = vpop.f32.mrb[0].mxu0
  %v412 = vadd.f32 0.0, %v411
  %v413 = vpop.f32.mrb[0].mxu0
  %v414 = vadd.f32 0.0, %v413
  %415 = vmatprep.mubr.bf16.mxu0 0
  %416 = vmatmul.mubr.bf16.gmra.mrb[0].mxu0 %v262
  %v417 = vpop.f32.mrb[0].mxu0
  %v418 = vadd.f32 0.0, %v417
  %v419 = vpop.f32.mrb[0].mxu0
  %v420 = vadd.f32 0.0, %v419
  %v421 = vpop.f32.mrb[0].mxu0
  %v422 = vadd.f32 0.0, %v421
  %v423 = vpop.f32.mrb[0].mxu0
  %v424 = vadd.f32 0.0, %v423
  %425 = vmatprep.mubr.bf16.mxu0 0
  %426 = vmatmul.mubr.bf16.gmra.mrb[0].mxu0 %v263
  %v427 = vpop.f32.mrb[0].mxu0
  %v428 = vadd.f32 0.0, %v427
  %v429 = vpop.f32.mrb[0].mxu0
  %v430 = vadd.f32 0.0, %v429
  %v431 = vpop.f32.mrb[0].mxu0
  %v432 = vadd.f32 0.0, %v431
  %v433 = vpop.f32.mrb[0].mxu0
  %v434 = vadd.f32 0.0, %v433
  %435 = vmatprep.mubr.bf16.mxu0 0
  %436 = vmatmul.mubr.bf16.gmra.mrb[0].mxu0 %v264
  %v437 = vpop.f32.mrb[0].mxu0
  %v438 = vadd.f32 0.0, %v437
  %v439 = vpop.f32.mrb[0].mxu0
  %v440 = vadd.f32 0.0, %v439
  %v441 = vpop.f32.mrb[0].mxu0
  %v442 = vadd.f32 0.0, %v441
  %v443 = vpop.f32.mrb[0].mxu0
  %v444 = vadd.f32 0.0, %v443
  %445 = vmatprep.mubr.bf16.mxu0 0
  %446 = vmatmul.mubr.bf16.gmra.mrb[0].mxu0 %v265
  %v447 = vpop.f32.mrb[0].mxu0
  %v448 = vadd.f32 0.0, %v447
  %v449 = vpop.f32.mrb[0].mxu0
  %v450 = vadd.f32 0.0, %v449
  %v451 = vpop.f32.mrb[0].mxu0
  %v452 = vadd.f32 0.0, %v451
  %v453 = vpop.f32.mrb[0].mxu0
  %v454 = vadd.f32 0.0, %v453
  %455 = vmatprep.mubr.bf16.mxu0 0
  %456 = vmatmul.mubr.bf16.gmra.mrb[0].mxu0 %v266
  %v457 = vpop.f32.mrb[0].mxu0
  %v458 = vadd.f32 0.0, %v457
  %v459 = vpop.f32.mrb[0].mxu0
  %v460 = vadd.f32 0.0, %v459
  %v461 = vpop.f32.mrb[0].mxu0
  %v462 = vadd.f32 0.0, %v461
  %v463 = vpop.f32.mrb[0].mxu0
  %v464 = vadd.f32 0.0, %v463
  %465 = vmatprep.mubr.bf16.mxu0 0
  %466 = vmatmul.mubr.bf16.gmra.mrb[0].mxu0 %v267
  %v467 = vpop.f32.mrb[0].mxu0
  %v468 = vadd.f32 0.0, %v467
  %v469 = vpop.f32.mrb[0].mxu0
  %v470 = vadd.f32 0.0, %v469
  %v471 = vpop.f32.mrb[0].mxu0
  %v472 = vadd.f32 0.0, %v471
  %v473 = vpop.f32.mrb[0].mxu0
  %v474 = vadd.f32 0.0, %v473
  %475 = vmatprep.mubr.bf16.mxu0 0
  %476 = vmatmul.mubr.bf16.gmra.mrb[0].mxu0 %v268
  %v477 = vpop.f32.mrb[0].mxu0
  %v478 = vadd.f32 0.0, %v477
  %v479 = vpop.f32.mrb[0].mxu0
  %v480 = vadd.f32 0.0, %v479
  %v481 = vpop.f32.mrb[0].mxu0
  %v482 = vadd.f32 0.0, %v481
  %v483 = vpop.f32.mrb[0].mxu0
  %v484 = vadd.f32 0.0, %v483
  %485 = vmatprep.mubr.bf16.mxu0 0
  %486 = vmatmul.mubr.bf16.gmra.mrb[0].mxu0 %v269
  %v487 = vpop.f32.mrb[0].mxu0
  %v488 = vadd.f32 0.0, %v487
  %v489 = vpop.f32.mrb[0].mxu0
  %v490 = vadd.f32 0.0, %v489
  %v491 = vpop.f32.mrb[0].mxu0
  %v492 = vadd.f32 0.0, %v491
  %v493 = vpop.f32.mrb[0].mxu0
  %v494 = vadd.f32 0.0, %v493
  %495 = vmatprep.mubr.bf16.mxu0 0
  %496 = vmatmul.mubr.bf16.gmra.mrb[0].mxu0 %v270
  %v497 = vpop.f32.mrb[0].mxu0
  %v498 = vadd.f32 0.0, %v497
  %v499 = vpop.f32.mrb[0].mxu0
  %v500 = vadd.f32 0.0, %v499
  %v501 = vpop.f32.mrb[0].mxu0
  %v502 = vadd.f32 0.0, %v501
  %v503 = vpop.f32.mrb[0].mxu0
  %v504 = vadd.f32 0.0, %v503
  %505 = vmatprep.mubr.bf16.mxu0 0
  %506 = vmatmul.mubr.bf16.gmra.mrb[0].mxu0 %v271
  %v507 = vpop.f32.mrb[0].mxu0
  %v508 = vadd.f32 0.0, %v507
  %v509 = vpop.f32.mrb[0].mxu0
  %v510 = vadd.f32 0.0, %v509
  %v511 = vpop.f32.mrb[0].mxu0
  %v512 = vadd.f32 0.0, %v511
  %v513 = vpop.f32.mrb[0].mxu0
  %v514 = vadd.f32 0.0, %v513
  %515 = vmatprep.mubr.bf16.mxu0 0
  %516 = vmatmul.mubr.bf16.gmra.mrb[0].mxu0 %v272
  %v517 = vpop.f32.mrb[0].mxu0
  %v518 = vadd.f32 0.0, %v517
  %v519 = vpop.f32.mrb[0].mxu0
  %v520 = vadd.f32 0.0, %v519
  %v521 = vpop.f32.mrb[0].mxu0
  %v522 = vadd.f32 0.0, %v521
  %v523 = vpop.f32.mrb[0].mxu0
  %v524 = vadd.f32 0.0, %v523
  %525 = vmatprep.mubr.bf16.mxu0 0
  %526 = vmatmul.mubr.bf16.gmra.mrb[0].mxu0 %v273
  %v527 = vpop.f32.mrb[0].mxu0
  %v528 = vadd.f32 0.0, %v527
  %v529 = vpop.f32.mrb[0].mxu0
  %v530 = vadd.f32 0.0, %v529
  %v531 = vpop.f32.mrb[0].mxu0
  %v532 = vadd.f32 0.0, %v531
  %v533 = vpop.f32.mrb[0].mxu0
  %v534 = vadd.f32 0.0, %v533
  %535 = vmatprep.mubr.bf16.mxu0 0
  %536 = vmatmul.mubr.bf16.gmra.mrb[0].mxu0 %v274
  %v537 = vpop.f32.mrb[0].mxu0
  %v538 = vadd.f32 0.0, %v537
  %v539 = vpop.f32.mrb[0].mxu0
  %v540 = vadd.f32 0.0, %v539
  %v541 = vpop.f32.mrb[0].mxu0
  %v542 = vadd.f32 0.0, %v541
  %v543 = vpop.f32.mrb[0].mxu0
  %v544 = vadd.f32 0.0, %v543
  %545 = vmatprep.mubr.bf16.mxu0 0
  %546 = vmatmul.mubr.bf16.gmra.mrb[0].mxu0 %v275
  %v547 = vpop.f32.mrb[0].mxu0
  %v548 = vadd.f32 0.0, %v547
  %v549 = vpop.f32.mrb[0].mxu0
  %v550 = vadd.f32 0.0, %v549
  %v551 = vpop.f32.mrb[0].mxu0
  %v552 = vadd.f32 0.0, %v551
  %v553 = vpop.f32.mrb[0].mxu0
  %v554 = vadd.f32 0.0, %v553
  %555 = vmatprep.mubr.bf16.mxu0 0
  %556 = vmatmul.mubr.bf16.gmra.mrb[0].mxu0 %v276
  %v557 = vpop.f32.mrb[0].mxu0
  %v558 = vadd.f32 0.0, %v557
  %v559 = vpop.f32.mrb[0].mxu0
  %v560 = vadd.f32 0.0, %v559
  %v561 = vpop.f32.mrb[0].mxu0
  %v562 = vadd.f32 0.0, %v561
  %v563 = vpop.f32.mrb[0].mxu0
  %v564 = vadd.f32 0.0, %v563
  %565 = vdwg.mxu0
  %v566 = vadd.f32 %v81, %v408
  %v567 = vadd.f32 %v82, %v410
  %v568 = vadd.f32 %v83, %v412
  %v569 = vadd.f32 %v84, %v414
  %v570 = vadd.f32 %v85, %v418
  %v571 = vadd.f32 %v86, %v420
  %v572 = vadd.f32 %v87, %v422
  %v573 = vadd.f32 %v88, %v424
  %v574 = vadd.f32 %v89, %v428
  %v575 = vadd.f32 %v90, %v430
  %v576 = vadd.f32 %v91, %v432
  %v577 = vadd.f32 %v92, %v434
  %v578 = vadd.f32 %v93, %v438
  %v579 = vadd.f32 %v94, %v440
  %v580 = vadd.f32 %v95, %v442
  %v581 = vadd.f32 %v96, %v444
  %v582 = vadd.f32 %v97, %v448
  %v583 = vadd.f32 %v98, %v450
  %v584 = vadd.f32 %v99, %v452
  %v585 = vadd.f32 %v100, %v454
  %v586 = vadd.f32 %v101, %v458
  %v587 = vadd.f32 %v102, %v460
  %v588 = vadd.f32 %v103, %v462
  %v589 = vadd.f32 %v104, %v464
  %v590 = vadd.f32 %v105, %v468
  %v591 = vadd.f32 %v106, %v470
  %v592 = vadd.f32 %v107, %v472
  %v593 = vadd.f32 %v108, %v474
  %v594 = vadd.f32 %v109, %v478
  %v595 = vadd.f32 %v110, %v480
  %v596 = vadd.f32 %v111, %v482
  %v597 = vadd.f32 %v112, %v484
  %v598 = vadd.f32 %v113, %v488
  %v599 = vadd.f32 %v114, %v490
  %v600 = vadd.f32 %v115, %v492
  %v601 = vadd.f32 %v116, %v494
  %v602 = vadd.f32 %v117, %v498
  %v603 = vadd.f32 %v118, %v500
  %v604 = vadd.f32 %v119, %v502
  %v605 = vadd.f32 %v120, %v504
  %v606 = vadd.f32 %v121, %v508
  %v607 = vadd.f32 %v122, %v510
  %v608 = vadd.f32 %v123, %v512
  %v609 = vadd.f32 %v124, %v514
  %v610 = vadd.f32 %v125, %v518
  %v611 = vadd.f32 %v126, %v520
  %v612 = vadd.f32 %v127, %v522
  %v613 = vadd.f32 %v128, %v524
  %v614 = vadd.f32 %v129, %v528
  %v615 = vadd.f32 %v130, %v530
  %v616 = vadd.f32 %v131, %v532
  %v617 = vadd.f32 %v132, %v534
  %v618 = vadd.f32 %v133, %v538
  %v619 = vadd.f32 %v134, %v540
  %v620 = vadd.f32 %v135, %v542
  %v621 = vadd.f32 %v136, %v544
  %v622 = vadd.f32 %v137, %v548
  %v623 = vadd.f32 %v138, %v550
  %v624 = vadd.f32 %v139, %v552
  %v625 = vadd.f32 %v140, %v554
  %v626 = vadd.f32 %v141, %v558
  %v627 = vadd.f32 %v142, %v560
  %v628 = vadd.f32 %v143, %v562
  %v629 = vadd.f32 %v144, %v564
  %630 = vst [vmem:[%s2] sm:$0xff] %v566
  %631 = vst [vmem:[%s2 + $0x8] sm:$0xff] %v567
  %632 = vst [vmem:[%s2 + $0x10] sm:$0xff] %v568
  %633 = vst [vmem:[%s2 + $0x18] sm:$0xff] %v569
  %634 = vst [vmem:[%s2 + $0x20] sm:$0xff] %v570
  %635 = vst [vmem:[%s2 + $0x28] sm:$0xff] %v571
  %636 = vst [vmem:[%s2 + $0x30] sm:$0xff] %v572
  %637 = vst [vmem:[%s2 + $0x38] sm:$0xff] %v573
  %638 = vst [vmem:[%s2 + $0x40] sm:$0xff] %v574
  %639 = vst [vmem:[%s2 + $0x48] sm:$0xff] %v575
  %640 = vst [vmem:[%s2 + $0x50] sm:$0xff] %v576
  %641 = vst [vmem:[%s2 + $0x58] sm:$0xff] %v577
  %642 = vst [vmem:[%s2 + $0x60] sm:$0xff] %v578
  %643 = vst [vmem:[%s2 + $0x68] sm:$0xff] %v579
  %644 = vst [vmem:[%s2 + $0x70] sm:$0xff] %v580
  %645 = vst [vmem:[%s2 + $0x78] sm:$0xff] %v581
  %646 = vst [vmem:[%s2 + $0x80] sm:$0xff] %v582
  %647 = vst [vmem:[%s2 + $0x88] sm:$0xff] %v583
  %648 = vst [vmem:[%s2 + $0x90] sm:$0xff] %v584
  %649 = vst [vmem:[%s2 + $0x98] sm:$0xff] %v585
  %650 = vst [vmem:[%s2 + $0xa0] sm:$0xff] %v586
  %651 = vst [vmem:[%s2 + $0xa8] sm:$0xff] %v587
  %652 = vst [vmem:[%s2 + $0xb0] sm:$0xff] %v588
  %653 = vst [vmem:[%s2 + $0xb8] sm:$0xff] %v589
  %654 = vst [vmem:[%s2 + $0xc0] sm:$0xff] %v590
  %655 = vst [vmem:[%s2 + $0xc8] sm:$0xff] %v591
  %656 = vst [vmem:[%s2 + $0xd0] sm:$0xff] %v592
  %657 = vst [vmem:[%s2 + $0xd8] sm:$0xff] %v593
  %658 = vst [vmem:[%s2 + $0xe0] sm:$0xff] %v594
  %659 = vst [vmem:[%s2 + $0xe8] sm:$0xff] %v595
  %660 = vst [vmem:[%s2 + $0xf0] sm:$0xff] %v596
  %661 = vst [vmem:[%s2 + $0xf8] sm:$0xff] %v597
  %662 = vst [vmem:[%s2 + $0x100] sm:$0xff] %v598
  %663 = vst [vmem:[%s2 + $0x108] sm:$0xff] %v599
  %664 = vst [vmem:[%s2 + $0x110] sm:$0xff] %v600
  %665 = vst [vmem:[%s2 + $0x118] sm:$0xff] %v601
  %666 = vst [vmem:[%s2 + $0x120] sm:$0xff] %v602
  %667 = vst [vmem:[%s2 + $0x128] sm:$0xff] %v603
  %668 = vst [vmem:[%s2 + $0x130] sm:$0xff] %v604
  %669 = vst [vmem:[%s2 + $0x138] sm:$0xff] %v605
  %670 = vst [vmem:[%s2 + $0x140] sm:$0xff] %v606
  %671 = vst [vmem:[%s2 + $0x148] sm:$0xff] %v607
  %672 = vst [vmem:[%s2 + $0x150] sm:$0xff] %v608
  %673 = vst [vmem:[%s2 + $0x158] sm:$0xff] %v609
  %674 = vst [vmem:[%s2 + $0x160] sm:$0xff] %v610
  %675 = vst [vmem:[%s2 + $0x168] sm:$0xff] %v611
  %676 = vst [vmem:[%s2 + $0x170] sm:$0xff] %v612
  %677 = vst [vmem:[%s2 + $0x178] sm:$0xff] %v613
  %678 = vst [vmem:[%s2 + $0x180] sm:$0xff] %v614
  %679 = vst [vmem:[%s2 + $0x188] sm:$0xff] %v615
  %680 = vst [vmem:[%s2 + $0x190] sm:$0xff] %v616
  %681 = vst [vmem:[%s2 + $0x198] sm:$0xff] %v617
  %682 = vst [vmem:[%s2 + $0x1a0] sm:$0xff] %v618
  %683 = vst [vmem:[%s2 + $0x1a8] sm:$0xff] %v619
  %684 = vst [vmem:[%s2 + $0x1b0] sm:$0xff] %v620
  %685 = vst [vmem:[%s2 + $0x1b8] sm:$0xff] %v621
  %686 = vst [vmem:[%s2 + $0x1c0] sm:$0xff] %v622
  %687 = vst [vmem:[%s2 + $0x1c8] sm:$0xff] %v623
  %688 = vst [vmem:[%s2 + $0x1d0] sm:$0xff] %v624
  %689 = vst [vmem:[%s2 + $0x1d8] sm:$0xff] %v625
  %690 = vst [vmem:[%s2 + $0x1e0] sm:$0xff] %v626
  %691 = vst [vmem:[%s2 + $0x1e8] sm:$0xff] %v627
  %692 = vst [vmem:[%s2 + $0x1f0] sm:$0xff] %v628
  %693 = vst [vmem:[%s2 + $0x1f8] sm:$0xff] %v629
  // Predicated region
  $region14: #{model_with_prompt_forward.3} parent=0 // pred_check
    _
  $region15: #{model_with_prompt_forward.3} parent=0 // pred_check_branch
    %695 = sbr.rel (0) target = $region17
  $region16: #{model_with_prompt_forward.3} parent=0 // pred_region
    _
  $region17: #{model_with_prompt_forward.3} parent=0 // pred_fallthru
    _
  // Predicated region
  $region18: #{model_with_prompt_forward.3} parent=0 // pred_check
    _
  $region19: #{model_with_prompt_forward.3} parent=0 // pred_check_branch
    %697 = sbr.rel (0) target = $region21
  $region20: #{model_with_prompt_forward.3} parent=0 // pred_region
    _
  $region21: #{model_with_prompt_forward.3} parent=0 // pred_fallthru
    _

</llo_original>
